<compile_context>
chip_gen: v7x
topology: tpu7x:2x2x1
jax: 0.10.0
libtpu: 0.0.40
codegen_flags: <defaults>
</compile_context>

<pallas_src>
import jax
import jax.numpy as jnp
from jax.experimental import pallas as pl
from jax.experimental.pallas import tpu as pltpu


_LEAKY_SLOPE = 0.01  # PyTorch nn.LeakyReLU default


def _leaky_relu(x, slope=_LEAKY_SLOPE):
    # max(x, slope*x) == LeakyReLU for 0 < slope < 1 (cheaper than cmp+select+mul).
    return jnp.maximum(x, slope * x)


def _pick_tile_i(N, D, bs, budget_bytes=8 * 1024 * 1024):
    """Largest row tile dividing N whose pair axis is lane-aligned (multiple of
    128) -- or covers a whole batch row (tile==N) -- and whose bf16 diff slab
    (D, tile*N) fits the VMEM budget.  Keeps >= 2 total grid steps when
    possible so both v7x TensorCores get work."""
    cands = []
    for t in range(1, N + 1):
        if N % t:
            continue
        if (t * N) % 128 != 0 and t != N:
            continue
        if t * N * D * 2 > budget_bytes:          # bf16 diff slab bytes
            continue
        cands.append(t)
    if not cands:
        # TODO(synk): N/D combinations where nothing lane-aligned fits the
        # budget fall back to one step per batch row (may exceed the budget).
        return N
    multi = [t for t in cands if bs * (N // t) >= 2]
    return max(multi) if multi else max(cands)


def _pick_group(tile_i, N):
    """Smallest group of rows g (dividing tile_i) whose slab width g*N is a
    multiple of 128 lanes -> full-lane, unmasked diff stores."""
    for g in range(1, tile_i + 1):
        if tile_i % g == 0 and (g * N) % 128 == 0:
            return g
    return 1   # fall back to per-row (masked) stores; still correct


def distance_func_pallas(x, params, tile_i=None):
    """x: (bs, N, D) float32. params: list of (W: (Cin, Cout), b: (1, Cout))."""
    bs, N, D = x.shape
    if tile_i is None:
        tile_i = _pick_tile_i(N, D, bs)
    if N % tile_i != 0:
        raise ValueError("tile_i must divide N")
    n_it = N // tile_i
    P = tile_i * N
    if n_it > 1 and P % 128 != 0:
        raise ValueError("tile_i * N must be a multiple of 128 when tiling")

    g = _pick_group(tile_i, N)
    n_groups = tile_i // g
    slab_w = g * N
    n_layers = len(params)

    def kernel(xi_ref, xa_ref, *rest):
        # xi_ref : (1, 1, D, tile_i)  channels-on-sublanes view of the row tile
        # xa_ref : (1, D, N)          channels-on-sublanes view of all rows
        # rest   : 2*n_layers weight/bias refs, out_ref, diff_ref (bf16 VMEM)
        out_ref, diff_ref = rest[-2], rest[-1]
        w_refs = rest[:-2]

        xa_t = xa_ref[0]                                           # (D, N) f32
        # Lane-tiled copy of xa, hoisted out of the group loop.
        xa_rep = xa_t if g == 1 else jnp.concatenate([xa_t] * g, axis=1)  # (D, slab_w)

        def build_slab(xi_g):
            # xi_g: (D, g).  Lane-repeat each row across N lanes via
            # concat-of-broadcasts -> (D, g*N), so sub/abs and the store run on
            # full 128-lane slabs.  Subtraction/abs in f32; cast to bf16 only
            # at the store (avoids cancellation error in x_i - x_j).
            cols = [jnp.broadcast_to(xi_g[:, k:k + 1], (D, N)) for k in range(g)]
            xi_rep = cols[0] if g == 1 else jnp.concatenate(cols, axis=1)
            return jnp.abs(xi_rep - xa_rep).astype(diff_ref.dtype)

        if n_groups <= 8:
            xi_t = xi_ref[0, 0]                                    # (D, tile_i)
            for t in range(n_groups):
                diff_ref[:, t * slab_w:(t + 1) * slab_w] = build_slab(
                    xi_t[:, t * g:(t + 1) * g])
        else:
            def group_body(t, carry):
                xi_g = xi_ref[0, 0, :, pl.ds(t * g, g)]
                start = t * slab_w
                if slab_w % 128 == 0:
                    start = pl.multiple_of(start, 128)
                diff_ref[:, pl.ds(start, slab_w)] = build_slab(xi_g)
                return carry
            jax.lax.fori_loop(0, n_groups, group_body, 0, unroll=4)

        h = diff_ref[...]                                          # (D, P) bf16

        # 1x1 convs (+ folded BN) as W^T @ h: MXU output width = P lanes (full).
        # bf16 matmul inputs, f32 accumulation; bias + LeakyReLU stay f32 (VPU).
        for li in range(n_layers - 1):
            w = w_refs[2 * li][...]                                # (Cout, Cin) bf16
            b = w_refs[2 * li + 1][...]                            # (Cout, 1)   f32
            h = jnp.dot(w, h.astype(jnp.bfloat16),
                        preferred_element_type=jnp.float32) + b
            h = _leaky_relu(h)

        # Final C_last -> 1 conv: VPU multiply + sublane reduce (no width-1 matmul).
        w_last = w_refs[-2][...]                                   # (C_last, 1) f32
        b_last = w_refs[-1][...]                                   # (1, 1)      f32
        out_ref[0] = jnp.sum(h * w_last, axis=0, keepdims=True) + b_last

    # Host-side layout plumbing (cheap): channels-on-sublanes views of x.
    x_cols = jnp.swapaxes(x.reshape(bs, n_it, tile_i, D), 2, 3)    # (bs, n_it, D, tile_i)
    x_t = jnp.swapaxes(x, 1, 2)                                    # (bs, D, N)

    weight_args, weight_specs = [], []
    for li, (W, b) in enumerate(params):
        if li < n_layers - 1:
            wk = jnp.asarray(W).T.astype(jnp.bfloat16)                      # (Cout, Cin)
            bk = jnp.reshape(jnp.asarray(b), (-1, 1)).astype(jnp.float32)   # (Cout, 1)
        else:
            wk = jnp.asarray(W).astype(jnp.float32)                         # (C_last, 1)
            bk = jnp.reshape(jnp.asarray(b), (1, 1)).astype(jnp.float32)    # (1, 1)
        weight_args += [wk, bk]
        weight_specs += [pl.BlockSpec(wk.shape, lambda bi, it: (0, 0)),
                         pl.BlockSpec(bk.shape, lambda bi, it: (0, 0))]

    grid_spec = pltpu.PrefetchScalarGridSpec(
        num_scalar_prefetch=0,
        grid=(bs, n_it),
        in_specs=[pl.BlockSpec((1, 1, D, tile_i), lambda bi, it: (bi, it, 0, 0)),
                  # Block index only changes with bi -> re-fetched once per batch
                  # row.  (On v7x with very large D*N this could additionally use
                  # pipeline_mode=pl.Buffered(1) to reclaim the second buffer.)
                  pl.BlockSpec((1, D, N), lambda bi, it: (bi, 0, 0))]
                 + weight_specs,
        out_specs=pl.BlockSpec((1, 1, P), lambda bi, it: (bi, 0, it)),
        scratch_shapes=[pltpu.VMEM((D, P), jnp.bfloat16)],          # bf16 diff slab
    )

    out_flat = pl.pallas_call(
        kernel,
        out_shape=jax.ShapeDtypeStruct((bs, 1, N * N), jnp.float32),
        grid_spec=grid_spec,
        compiler_params=pltpu.CompilerParams(
            dimension_semantics=("parallel", "parallel"),
            vmem_limit_bytes=48 * 1024 * 1024),
    )(x_cols, x_t, *weight_args)

    return out_flat.reshape(bs, N, N)


def make_params(key, in_dimen, nf_adj, ratio=(2, 2, 1, 1), eps=1e-5):
    """Deterministically build conv weights + folded inference-mode BN."""
    chans = [in_dimen] + [nf_adj * r for r in ratio]
    params = []
    for i in range(len(ratio)):
        cin, cout = chans[i], chans[i + 1]
        key, k1, k2, k3, k4, k5, k6 = jax.random.split(key, 7)
        W = jax.random.normal(k1, (cin, cout), jnp.float32) * 0.1
        b = jax.random.normal(k2, (1, cout), jnp.float32) * 0.05
        gamma = 1.0 + 0.1 * jax.random.normal(k3, (cout,), jnp.float32)
        beta = 0.05 * jax.random.normal(k4, (cout,), jnp.float32)
        r_mean = 0.05 * jax.random.normal(k5, (cout,), jnp.float32)
        r_var = 0.5 + jax.random.uniform(k6, (cout,), jnp.float32)
        scale = gamma / jnp.sqrt(r_var + eps)
        W_eff = W * scale[None, :]
        b_eff = (b - r_mean[None, :]) * scale[None, :] + beta[None, :]
        params.append((W_eff, b_eff))
    # final 1x1 conv: C_last -> 1 (no BN / activation)
    key, k1, k2 = jax.random.split(key, 3)
    W = jax.random.normal(k1, (chans[-1], 1), jnp.float32) * 0.1
    b = jax.random.normal(k2, (1, 1), jnp.float32) * 0.05
    params.append((W, b))
    return params


def distance_func_ref(x, params):
    """Pure-JAX f32 reference of the same math, for a correctness check."""
    diff = jnp.abs(x[:, :, None, :] - x[:, None, :, :])   # (bs, N, N, D)
    h = diff
    for li, (W, b) in enumerate(params):
        h = jnp.einsum('bijc,co->bijo', h, W) + b[None, None]
        if li < len(params) - 1:
            h = _leaky_relu(h)
    return h[..., 0]


if __name__ == "__main__":
    bs, N, D = 2, 16, 32
    nf_adj = 8

    key = jax.random.PRNGKey(0)
    kx, kp = jax.random.split(key)
    x = jax.random.normal(kx, (bs, N, D), jnp.float32)
    params = make_params(kp, in_dimen=D, nf_adj=nf_adj)

    out = distance_func_pallas(x, params)   # auto tile: tile_i=16 -> P=256 lanes, g=8
    out = jax.block_until_ready(out)

    ref = distance_func_ref(x, params)
    assert out.shape == (bs, N, N)
    # bf16 matmul inputs / bf16 diff slab (f32 accumulation) => looser tolerance than pure f32.
    assert jnp.allclose(out, ref, atol=3e-2, rtol=3e-2), float(jnp.max(jnp.abs(out - ref)))

    print("KERNEL_OK")
</pallas_src>

<mosaic_0001>
module attributes {stable_mosaic.version = 11 : i64} {
  func.func @kernel(%arg0: i32, %arg1: i32, %arg2: memref<1x1x32x16xf32, #tpu.memory_space<vmem>>, %arg3: memref<1x32x16xf32, #tpu.memory_space<vmem>>, %arg4: memref<16x32xbf16, #tpu.memory_space<vmem>>, %arg5: memref<16x1xf32, #tpu.memory_space<vmem>>, %arg6: memref<16x16xbf16, #tpu.memory_space<vmem>>, %arg7: memref<16x1xf32, #tpu.memory_space<vmem>>, %arg8: memref<8x16xbf16, #tpu.memory_space<vmem>>, %arg9: memref<8x1xf32, #tpu.memory_space<vmem>>, %arg10: memref<8x8xbf16, #tpu.memory_space<vmem>>, %arg11: memref<8x1xf32, #tpu.memory_space<vmem>>, %arg12: memref<8x1xf32, #tpu.memory_space<vmem>>, %arg13: memref<1x1xf32, #tpu.memory_space<vmem>>, %arg14: memref<1x1x256xf32, #tpu.memory_space<vmem>>, %arg15: memref<32x256xbf16, #tpu.memory_space<vmem>>) attributes {dimension_semantics = [#tpu.dimension_semantics<parallel>, #tpu.dimension_semantics<parallel>], iteration_bounds = array<i64: 2, 1>, scalar_prefetch = 0 : i64, scratch_operands = 1 : i64, tpu.core_type = #tpu.core_type<tc>, window_params = [{transform_indices = @transform_0, window_bounds = array<i64: 1, 1, 32, 16>}, {transform_indices = @transform_1, window_bounds = array<i64: 1, 32, 16>}, {pipeline_mode = #tpu.pipeline_mode<synchronous>, transform_indices = @transform_2, window_bounds = array<i64: 16, 32>}, {pipeline_mode = #tpu.pipeline_mode<synchronous>, transform_indices = @transform_3, window_bounds = array<i64: 16, 1>}, {pipeline_mode = #tpu.pipeline_mode<synchronous>, transform_indices = @transform_4, window_bounds = array<i64: 16, 16>}, {pipeline_mode = #tpu.pipeline_mode<synchronous>, transform_indices = @transform_5, window_bounds = array<i64: 16, 1>}, {pipeline_mode = #tpu.pipeline_mode<synchronous>, transform_indices = @transform_6, window_bounds = array<i64: 8, 16>}, {pipeline_mode = #tpu.pipeline_mode<synchronous>, transform_indices = @transform_7, window_bounds = array<i64: 8, 1>}, {pipeline_mode = #tpu.pipeline_mode<synchronous>, transform_indices = @transform_8, window_bounds = array<i64: 8, 8>}, {pipeline_mode = #tpu.pipeline_mode<synchronous>, transform_indices = @transform_9, window_bounds = array<i64: 8, 1>}, {pipeline_mode = #tpu.pipeline_mode<synchronous>, transform_indices = @transform_10, window_bounds = array<i64: 8, 1>}, {pipeline_mode = #tpu.pipeline_mode<synchronous>, transform_indices = @transform_11, window_bounds = array<i64: 1, 1>}, {transform_indices = @transform_12, window_bounds = array<i64: 1, 1, 256>}]} {
    %c0 = arith.constant 0 : index
    %c0_0 = arith.constant 0 : index
    %c0_1 = arith.constant 0 : index
    %0 = vector.load %arg3[%c0, %c0_0, %c0_1] : memref<1x32x16xf32, #tpu.memory_space<vmem>>, vector<1x32x16xf32>
    %1 = vector.shape_cast %0 : vector<1x32x16xf32> to vector<32x16xf32>
    %2 = tpu.concatenate %1, %1, %1, %1, %1, %1, %1, %1 in 1 : vector<32x16xf32>, vector<32x16xf32>, vector<32x16xf32>, vector<32x16xf32>, vector<32x16xf32>, vector<32x16xf32>, vector<32x16xf32>, vector<32x16xf32> -> vector<32x128xf32>
    %c0_2 = arith.constant 0 : index
    %c0_3 = arith.constant 0 : index
    %c0_4 = arith.constant 0 : index
    %c0_5 = arith.constant 0 : index
    %3 = vector.load %arg2[%c0_2, %c0_3, %c0_4, %c0_5] : memref<1x1x32x16xf32, #tpu.memory_space<vmem>>, vector<1x1x32x16xf32>
    %4 = vector.shape_cast %3 : vector<1x1x32x16xf32> to vector<32x16xf32>
    %5 = vector.extract_strided_slice %4 {offsets = [0, 0], sizes = [32, 8], strides = [1, 1]} : vector<32x16xf32> to vector<32x8xf32>
    %6 = vector.extract_strided_slice %5 {offsets = [0, 0], sizes = [32, 1], strides = [1, 1]} : vector<32x8xf32> to vector<32x1xf32>
    %7 = vector.shape_cast %6 : vector<32x1xf32> to vector<32x1xf32>
    %8 = vector.broadcast %7 : vector<32x1xf32> to vector<32x16xf32>
    %9 = vector.extract_strided_slice %5 {offsets = [0, 1], sizes = [32, 1], strides = [1, 1]} : vector<32x8xf32> to vector<32x1xf32>
    %10 = vector.shape_cast %9 : vector<32x1xf32> to vector<32x1xf32>
    %11 = vector.broadcast %10 : vector<32x1xf32> to vector<32x16xf32>
    %12 = vector.extract_strided_slice %5 {offsets = [0, 2], sizes = [32, 1], strides = [1, 1]} : vector<32x8xf32> to vector<32x1xf32>
    %13 = vector.shape_cast %12 : vector<32x1xf32> to vector<32x1xf32>
    %14 = vector.broadcast %13 : vector<32x1xf32> to vector<32x16xf32>
    %15 = vector.extract_strided_slice %5 {offsets = [0, 3], sizes = [32, 1], strides = [1, 1]} : vector<32x8xf32> to vector<32x1xf32>
    %16 = vector.shape_cast %15 : vector<32x1xf32> to vector<32x1xf32>
    %17 = vector.broadcast %16 : vector<32x1xf32> to vector<32x16xf32>
    %18 = vector.extract_strided_slice %5 {offsets = [0, 4], sizes = [32, 1], strides = [1, 1]} : vector<32x8xf32> to vector<32x1xf32>
    %19 = vector.shape_cast %18 : vector<32x1xf32> to vector<32x1xf32>
    %20 = vector.broadcast %19 : vector<32x1xf32> to vector<32x16xf32>
    %21 = vector.extract_strided_slice %5 {offsets = [0, 5], sizes = [32, 1], strides = [1, 1]} : vector<32x8xf32> to vector<32x1xf32>
    %22 = vector.shape_cast %21 : vector<32x1xf32> to vector<32x1xf32>
    %23 = vector.broadcast %22 : vector<32x1xf32> to vector<32x16xf32>
    %24 = vector.extract_strided_slice %5 {offsets = [0, 6], sizes = [32, 1], strides = [1, 1]} : vector<32x8xf32> to vector<32x1xf32>
    %25 = vector.shape_cast %24 : vector<32x1xf32> to vector<32x1xf32>
    %26 = vector.broadcast %25 : vector<32x1xf32> to vector<32x16xf32>
    %27 = vector.extract_strided_slice %5 {offsets = [0, 7], sizes = [32, 1], strides = [1, 1]} : vector<32x8xf32> to vector<32x1xf32>
    %28 = vector.shape_cast %27 : vector<32x1xf32> to vector<32x1xf32>
    %29 = vector.broadcast %28 : vector<32x1xf32> to vector<32x16xf32>
    %30 = tpu.concatenate %8, %11, %14, %17, %20, %23, %26, %29 in 1 : vector<32x16xf32>, vector<32x16xf32>, vector<32x16xf32>, vector<32x16xf32>, vector<32x16xf32>, vector<32x16xf32>, vector<32x16xf32>, vector<32x16xf32> -> vector<32x128xf32>
    %31 = arith.subf %30, %2 : vector<32x128xf32>
    %32 = math.absf %31 : vector<32x128xf32>
    %33 = arith.truncf %32 : vector<32x128xf32> to vector<32x128xbf16>
    %c0_6 = arith.constant 0 : index
    %c0_7 = arith.constant 0 : index
    %34 = vector.load %arg15[%c0_6, %c0_7] : memref<32x256xbf16, #tpu.memory_space<vmem>>, vector<32x128xbf16>
    tpu.vector_store %arg15[%c0_6, %c0_7], %33 {strides = array<i32>} : memref<32x256xbf16, #tpu.memory_space<vmem>>, vector<32x128xbf16>,
    %35 = vector.extract_strided_slice %4 {offsets = [0, 8], sizes = [32, 8], strides = [1, 1]} : vector<32x16xf32> to vector<32x8xf32>
    %36 = vector.extract_strided_slice %35 {offsets = [0, 0], sizes = [32, 1], strides = [1, 1]} : vector<32x8xf32> to vector<32x1xf32>
    %37 = vector.shape_cast %36 : vector<32x1xf32> to vector<32x1xf32>
    %38 = vector.broadcast %37 : vector<32x1xf32> to vector<32x16xf32>
    %39 = vector.extract_strided_slice %35 {offsets = [0, 1], sizes = [32, 1], strides = [1, 1]} : vector<32x8xf32> to vector<32x1xf32>
    %40 = vector.shape_cast %39 : vector<32x1xf32> to vector<32x1xf32>
    %41 = vector.broadcast %40 : vector<32x1xf32> to vector<32x16xf32>
    %42 = vector.extract_strided_slice %35 {offsets = [0, 2], sizes = [32, 1], strides = [1, 1]} : vector<32x8xf32> to vector<32x1xf32>
    %43 = vector.shape_cast %42 : vector<32x1xf32> to vector<32x1xf32>
    %44 = vector.broadcast %43 : vector<32x1xf32> to vector<32x16xf32>
    %45 = vector.extract_strided_slice %35 {offsets = [0, 3], sizes = [32, 1], strides = [1, 1]} : vector<32x8xf32> to vector<32x1xf32>
    %46 = vector.shape_cast %45 : vector<32x1xf32> to vector<32x1xf32>
    %47 = vector.broadcast %46 : vector<32x1xf32> to vector<32x16xf32>
    %48 = vector.extract_strided_slice %35 {offsets = [0, 4], sizes = [32, 1], strides = [1, 1]} : vector<32x8xf32> to vector<32x1xf32>
    %49 = vector.shape_cast %48 : vector<32x1xf32> to vector<32x1xf32>
    %50 = vector.broadcast %49 : vector<32x1xf32> to vector<32x16xf32>
    %51 = vector.extract_strided_slice %35 {offsets = [0, 5], sizes = [32, 1], strides = [1, 1]} : vector<32x8xf32> to vector<32x1xf32>
    %52 = vector.shape_cast %51 : vector<32x1xf32> to vector<32x1xf32>
    %53 = vector.broadcast %52 : vector<32x1xf32> to vector<32x16xf32>
    %54 = vector.extract_strided_slice %35 {offsets = [0, 6], sizes = [32, 1], strides = [1, 1]} : vector<32x8xf32> to vector<32x1xf32>
    %55 = vector.shape_cast %54 : vector<32x1xf32> to vector<32x1xf32>
    %56 = vector.broadcast %55 : vector<32x1xf32> to vector<32x16xf32>
    %57 = vector.extract_strided_slice %35 {offsets = [0, 7], sizes = [32, 1], strides = [1, 1]} : vector<32x8xf32> to vector<32x1xf32>
    %58 = vector.shape_cast %57 : vector<32x1xf32> to vector<32x1xf32>
    %59 = vector.broadcast %58 : vector<32x1xf32> to vector<32x16xf32>
    %60 = tpu.concatenate %38, %41, %44, %47, %50, %53, %56, %59 in 1 : vector<32x16xf32>, vector<32x16xf32>, vector<32x16xf32>, vector<32x16xf32>, vector<32x16xf32>, vector<32x16xf32>, vector<32x16xf32>, vector<32x16xf32> -> vector<32x128xf32>
    %61 = arith.subf %60, %2 : vector<32x128xf32>
    %62 = math.absf %61 : vector<32x128xf32>
    %63 = arith.truncf %62 : vector<32x128xf32> to vector<32x128xbf16>
    %c0_8 = arith.constant 0 : index
    %c128 = arith.constant 128 : index
    %64 = vector.load %arg15[%c0_8, %c128] : memref<32x256xbf16, #tpu.memory_space<vmem>>, vector<32x128xbf16>
    tpu.vector_store %arg15[%c0_8, %c128], %63 {strides = array<i32>} : memref<32x256xbf16, #tpu.memory_space<vmem>>, vector<32x128xbf16>,
    %c0_9 = arith.constant 0 : index
    %c0_10 = arith.constant 0 : index
    %65 = vector.load %arg15[%c0_9, %c0_10] : memref<32x256xbf16, #tpu.memory_space<vmem>>, vector<32x256xbf16>
    %c0_11 = arith.constant 0 : index
    %c0_12 = arith.constant 0 : index
    %66 = vector.load %arg4[%c0_11, %c0_12] : memref<16x32xbf16, #tpu.memory_space<vmem>>, vector<16x32xbf16>
    %c0_13 = arith.constant 0 : index
    %c0_14 = arith.constant 0 : index
    %67 = vector.load %arg5[%c0_13, %c0_14] : memref<16x1xf32, #tpu.memory_space<vmem>>, vector<16x1xf32>
    %cst = arith.constant dense<0.000000e+00> : vector<16x256xf32>
    %68 = tpu.matmul %66, %65, %cst {dimension_numbers = #tpu.dot_dimension_numbers<[1], [0], [0], [1], [0, 0, 1, 1], [], []>} : vector<16x32xbf16>, vector<32x256xbf16>, vector<16x256xf32> -> vector<16x256xf32>
    %69 = vector.broadcast %67 : vector<16x1xf32> to vector<16x256xf32>
    %70 = arith.addf %68, %69 : vector<16x256xf32>
    %cst_15 = arith.constant 0.00999999977 : f32
    %71 = vector.broadcast %cst_15 : f32 to vector<16x256xf32>
    %72 = arith.mulf %71, %70 : vector<16x256xf32>
    %73 = arith.maximumf %70, %72 : vector<16x256xf32>
    %c0_16 = arith.constant 0 : index
    %c0_17 = arith.constant 0 : index
    %74 = vector.load %arg6[%c0_16, %c0_17] : memref<16x16xbf16, #tpu.memory_space<vmem>>, vector<16x16xbf16>
    %c0_18 = arith.constant 0 : index
    %c0_19 = arith.constant 0 : index
    %75 = vector.load %arg7[%c0_18, %c0_19] : memref<16x1xf32, #tpu.memory_space<vmem>>, vector<16x1xf32>
    %76 = arith.truncf %73 : vector<16x256xf32> to vector<16x256xbf16>
    %cst_20 = arith.constant dense<0.000000e+00> : vector<16x256xf32>
    %77 = tpu.matmul %74, %76, %cst_20 {dimension_numbers = #tpu.dot_dimension_numbers<[1], [0], [0], [1], [0, 0, 1, 1], [], []>} : vector<16x16xbf16>, vector<16x256xbf16>, vector<16x256xf32> -> vector<16x256xf32>
    %78 = vector.broadcast %75 : vector<16x1xf32> to vector<16x256xf32>
    %79 = arith.addf %77, %78 : vector<16x256xf32>
    %cst_21 = arith.constant 0.00999999977 : f32
    %80 = vector.broadcast %cst_21 : f32 to vector<16x256xf32>
    %81 = arith.mulf %80, %79 : vector<16x256xf32>
    %82 = arith.maximumf %79, %81 : vector<16x256xf32>
    %c0_22 = arith.constant 0 : index
    %c0_23 = arith.constant 0 : index
    %83 = vector.load %arg8[%c0_22, %c0_23] : memref<8x16xbf16, #tpu.memory_space<vmem>>, vector<8x16xbf16>
    %c0_24 = arith.constant 0 : index
    %c0_25 = arith.constant 0 : index
    %84 = vector.load %arg9[%c0_24, %c0_25] : memref<8x1xf32, #tpu.memory_space<vmem>>, vector<8x1xf32>
    %85 = arith.truncf %82 : vector<16x256xf32> to vector<16x256xbf16>
    %cst_26 = arith.constant dense<0.000000e+00> : vector<8x256xf32>
    %86 = tpu.matmul %83, %85, %cst_26 {dimension_numbers = #tpu.dot_dimension_numbers<[1], [0], [0], [1], [0, 0, 1, 1], [], []>} : vector<8x16xbf16>, vector<16x256xbf16>, vector<8x256xf32> -> vector<8x256xf32>
    %87 = vector.broadcast %84 : vector<8x1xf32> to vector<8x256xf32>
    %88 = arith.addf %86, %87 : vector<8x256xf32>
    %cst_27 = arith.constant 0.00999999977 : f32
    %89 = vector.broadcast %cst_27 : f32 to vector<8x256xf32>
    %90 = arith.mulf %89, %88 : vector<8x256xf32>
    %91 = arith.maximumf %88, %90 : vector<8x256xf32>
    %c0_28 = arith.constant 0 : index
    %c0_29 = arith.constant 0 : index
    %92 = vector.load %arg10[%c0_28, %c0_29] : memref<8x8xbf16, #tpu.memory_space<vmem>>, vector<8x8xbf16>
    %c0_30 = arith.constant 0 : index
    %c0_31 = arith.constant 0 : index
    %93 = vector.load %arg11[%c0_30, %c0_31] : memref<8x1xf32, #tpu.memory_space<vmem>>, vector<8x1xf32>
    %94 = arith.truncf %91 : vector<8x256xf32> to vector<8x256xbf16>
    %cst_32 = arith.constant dense<0.000000e+00> : vector<8x256xf32>
    %95 = tpu.matmul %92, %94, %cst_32 {dimension_numbers = #tpu.dot_dimension_numbers<[1], [0], [0], [1], [0, 0, 1, 1], [], []>} : vector<8x8xbf16>, vector<8x256xbf16>, vector<8x256xf32> -> vector<8x256xf32>
    %96 = vector.broadcast %93 : vector<8x1xf32> to vector<8x256xf32>
    %97 = arith.addf %95, %96 : vector<8x256xf32>
    %cst_33 = arith.constant 0.00999999977 : f32
    %98 = vector.broadcast %cst_33 : f32 to vector<8x256xf32>
    %99 = arith.mulf %98, %97 : vector<8x256xf32>
    %100 = arith.maximumf %97, %99 : vector<8x256xf32>
    %c0_34 = arith.constant 0 : index
    %c0_35 = arith.constant 0 : index
    %101 = vector.load %arg12[%c0_34, %c0_35] : memref<8x1xf32, #tpu.memory_space<vmem>>, vector<8x1xf32>
    %c0_36 = arith.constant 0 : index
    %c0_37 = arith.constant 0 : index
    %102 = vector.load %arg13[%c0_36, %c0_37] : memref<1x1xf32, #tpu.memory_space<vmem>>, vector<1x1xf32>
    %103 = vector.broadcast %101 : vector<8x1xf32> to vector<8x256xf32>
    %104 = arith.mulf %100, %103 : vector<8x256xf32>
    %cst_38 = arith.constant dense<0.000000e+00> : vector<256xf32>
    %105 = vector.multi_reduction <add>, %104, %cst_38 [0] : vector<8x256xf32> to vector<256xf32>
    %106 = vector.shape_cast %105 : vector<256xf32> to vector<1x256xf32>
    %107 = vector.broadcast %102 : vector<1x1xf32> to vector<1x256xf32>
    %108 = arith.addf %106, %107 : vector<1x256xf32>
    %c0_39 = arith.constant 0 : index
    %c0_40 = arith.constant 0 : index
    %c0_41 = arith.constant 0 : index
    %109 = vector.load %arg14[%c0_39, %c0_40, %c0_41] : memref<1x1x256xf32, #tpu.memory_space<vmem>>, vector<1x1x256xf32>
    %110 = vector.shape_cast %109 : vector<1x1x256xf32> to vector<1x256xf32>
    %111 = vector.shape_cast %108 : vector<1x256xf32> to vector<1x1x256xf32>
    tpu.vector_store %arg14[%c0_39, %c0_40, %c0_41], %111 {strides = array<i32>} : memref<1x1x256xf32, #tpu.memory_space<vmem>>, vector<1x1x256xf32>,
    return
  }
  func.func @transform_0(%arg0: i32, %arg1: i32) -> (i32, i32, i32, i32) {
    %c0_i32 = arith.constant 0 : i32
    %c0_i32_0 = arith.constant 0 : i32
    %c0_i32_1 = arith.constant 0 : i32
    return %arg0, %arg1, %c0_i32, %c0_i32_0 : i32, i32, i32, i32
  }
  func.func @transform_1(%arg0: i32, %arg1: i32) -> (i32, i32, i32) {
    %c0_i32 = arith.constant 0 : i32
    %c0_i32_0 = arith.constant 0 : i32
    %c0_i32_1 = arith.constant 0 : i32
    return %arg0, %c0_i32, %c0_i32_0 : i32, i32, i32
  }
  func.func @transform_2(%arg0: i32, %arg1: i32) -> (i32, i32) {
    %c0_i32 = arith.constant 0 : i32
    %c0_i32_0 = arith.constant 0 : i32
    %c0_i32_1 = arith.constant 0 : i32
    return %c0_i32, %c0_i32_0 : i32, i32
  }
  func.func @transform_3(%arg0: i32, %arg1: i32) -> (i32, i32) {
    %c0_i32 = arith.constant 0 : i32
    %c0_i32_0 = arith.constant 0 : i32
    %c0_i32_1 = arith.constant 0 : i32
    return %c0_i32, %c0_i32_0 : i32, i32
  }
  func.func @transform_4(%arg0: i32, %arg1: i32) -> (i32, i32) {
    %c0_i32 = arith.constant 0 : i32
    %c0_i32_0 = arith.constant 0 : i32
    %c0_i32_1 = arith.constant 0 : i32
    return %c0_i32, %c0_i32_0 : i32, i32
  }
  func.func @transform_5(%arg0: i32, %arg1: i32) -> (i32, i32) {
    %c0_i32 = arith.constant 0 : i32
    %c0_i32_0 = arith.constant 0 : i32
    %c0_i32_1 = arith.constant 0 : i32
    return %c0_i32, %c0_i32_0 : i32, i32
  }
  func.func @transform_6(%arg0: i32, %arg1: i32) -> (i32, i32) {
    %c0_i32 = arith.constant 0 : i32
    %c0_i32_0 = arith.constant 0 : i32
    %c0_i32_1 = arith.constant 0 : i32
    return %c0_i32, %c0_i32_0 : i32, i32
  }
  func.func @transform_7(%arg0: i32, %arg1: i32) -> (i32, i32) {
    %c0_i32 = arith.constant 0 : i32
    %c0_i32_0 = arith.constant 0 : i32
    %c0_i32_1 = arith.constant 0 : i32
    return %c0_i32, %c0_i32_0 : i32, i32
  }
  func.func @transform_8(%arg0: i32, %arg1: i32) -> (i32, i32) {
    %c0_i32 = arith.constant 0 : i32
    %c0_i32_0 = arith.constant 0 : i32
    %c0_i32_1 = arith.constant 0 : i32
    return %c0_i32, %c0_i32_0 : i32, i32
  }
  func.func @transform_9(%arg0: i32, %arg1: i32) -> (i32, i32) {
    %c0_i32 = arith.constant 0 : i32
    %c0_i32_0 = arith.constant 0 : i32
    %c0_i32_1 = arith.constant 0 : i32
    return %c0_i32, %c0_i32_0 : i32, i32
  }
  func.func @transform_10(%arg0: i32, %arg1: i32) -> (i32, i32) {
    %c0_i32 = arith.constant 0 : i32
    %c0_i32_0 = arith.constant 0 : i32
    %c0_i32_1 = arith.constant 0 : i32
    return %c0_i32, %c0_i32_0 : i32, i32
  }
  func.func @transform_11(%arg0: i32, %arg1: i32) -> (i32, i32) {
    %c0_i32 = arith.constant 0 : i32
    %c0_i32_0 = arith.constant 0 : i32
    %c0_i32_1 = arith.constant 0 : i32
    return %c0_i32, %c0_i32_0 : i32, i32
  }
  func.func @transform_12(%arg0: i32, %arg1: i32) -> (i32, i32, i32) {
    %c0_i32 = arith.constant 0 : i32
    %c0_i32_0 = arith.constant 0 : i32
    return %arg0, %c0_i32, %arg1 : i32, i32, i32
  }
}

</mosaic_0001>

<llo_original>
// kernel: tpu_custom_call.1
$region0: #{tpu_custom_call.1}
  #allocation0 [shape = 'u32[]', space=smem, size = 0x4, offset = 0x4, fixed_abs, tag = 'smem constant byte address 0x4 - core index']
  #allocation1 [shape = 'u32[144,128]{1,0:T(1,128)}', space=vmem, size = 0x12000, scoped, tag = 'internal scratch']
  #allocation2 [shape = 'bf16[32,256]{1,0:T(16,128)(2,1)}', space=vmem, size = 0x4000, scoped, tag = 'scratch operand']
  #allocation3 [shape = 'f32[1,1]{1,0:T(1,128)S(1)}', space=vmem, size = 0x200, scoped, tag = 'scoped memory for tpu_custom_call.1']
  %s0 = inlined_call_operand.vmem [shape: f32[2,1,32,16], index: 0, kind: input, shape index: {}]
  %s1 = inlined_call_operand.vmem [shape: f32[2,32,16], index: 1, kind: input, shape index: {}]
  %s2 = inlined_call_operand.vmem [shape: bf16[16,32], index: 2, kind: input, shape index: {}]
  %s3 = inlined_call_operand.vmem [shape: f32[16,1], index: 3, kind: input, shape index: {}]
  %s4 = inlined_call_operand.vmem [shape: bf16[16,16], index: 4, kind: input, shape index: {}]
  %s5 = inlined_call_operand.vmem [shape: f32[16,1], index: 5, kind: input, shape index: {}]
  %s6 = inlined_call_operand.vmem [shape: bf16[8,16], index: 6, kind: input, shape index: {}]
  %s7 = inlined_call_operand.vmem [shape: f32[8,1], index: 7, kind: input, shape index: {}]
  %s8 = inlined_call_operand.vmem [shape: bf16[8,8], index: 8, kind: input, shape index: {}]
  %s9 = inlined_call_operand.vmem [shape: f32[8,1], index: 9, kind: input, shape index: {}]
  %s10 = inlined_call_operand.vmem [shape: f32[8,1], index: 10, kind: input, shape index: {}]
  %s11 = inlined_call_operand.<no memory space> [shape: f32[1,1], index: 11, kind: input, shape index: {}]
  %s12 = inlined_call_operand.hbm [shape: f32[2,1,256], index: 12, kind: output, shape index: {}]
  %s13 = sld [smem:[#allocation0]]
  $region81: #{tpu_custom_call.1} parent=0
    _
  %s15 = ssub.s32 1, %s13
  %s16 = scalar_select 0, %s15, %s13
  %v17 = vstv %s11
  %18 = vst [vmem:[#allocation3] sm:$0x1] %v17
  $region1: #{tpu_custom_call.1} parent=0
    #allocation4 [shape = 'u8[2048]{0}', space=vmem, size = 0x800, scoped, tag = 'output window, operand 0']
    #allocation5 [shape = 's32[2]{0}', space=sflag, size = 0x8, scoped, tag = 'scoped memory for tpu_custom_call.1']
    %19 = vsyncpa [#allocation5], 0
    %s20 = scalar_lea.sflag [#allocation5], 1
    %21 = vsyncpa %s20, 0
    loop: start=0, step=1, limit=4
    $region2: #{tpu_custom_call.1} parent=1 // loop_pre_header
      _
    $region3: #{tpu_custom_call.1} parent=1 // loop_header
      %s23 = sphi 0, %s27
      %p24 = scmp.ge.s32.totalorder %s23, 4
      %s30 = sphi 0, %s42
      %s31 = sphi 0, %s38
      %s32 = sphi 0, %s30
      %s33 = sphi 0, %s31
      %s34 = sphi 0, %s32
      %s35 = sphi 0, %s33
      %s47 = sphi 0, %s49
      %s50 = sphi 0, %s47
      %s51 = sphi 0, %s50
      %s67 = sphi 0, %s51
      %s73 = sphi 0, %s75
      %s76 = sphi 0, %s73
      %s77 = sphi 0, %s76
      %s93 = sphi 0, %s77
      %s97 = sphi 0, %s97
      %s99 = sphi 0, %s97
      %s100 = sphi 0, %s99
      %s114 = sphi 0, %s100
      %s118 = sphi 0, %s118
      %s120 = sphi 0, %s118
      %s121 = sphi 0, %s120
      %s135 = sphi 0, %s121
      %s139 = sphi 0, %s139
      %s141 = sphi 0, %s139
      %s142 = sphi 0, %s141
      %s156 = sphi 0, %s142
      %s160 = sphi 0, %s160
      %s162 = sphi 0, %s160
      %s163 = sphi 0, %s162
      %s177 = sphi 0, %s163
      %s181 = sphi 0, %s181
      %s183 = sphi 0, %s181
      %s184 = sphi 0, %s183
      %s198 = sphi 0, %s184
      %s202 = sphi 0, %s202
      %s204 = sphi 0, %s202
      %s205 = sphi 0, %s204
      %s219 = sphi 0, %s205
      %s223 = sphi 0, %s223
      %s225 = sphi 0, %s223
      %s226 = sphi 0, %s225
      %s240 = sphi 0, %s226
      %s244 = sphi 0, %s244
      %s246 = sphi 0, %s244
      %s247 = sphi 0, %s246
      %s261 = sphi 0, %s247
      %s265 = sphi 0, %s265
      %s267 = sphi 0, %s265
      %s268 = sphi 0, %s267
      %s282 = sphi 0, %s268
      %s286 = sphi 0, %s286
      %s288 = sphi 0, %s286
      %s289 = sphi 0, %s288
      %s303 = sphi 0, %s289
      %s311 = sphi 0, %s313
      %s314 = sphi 0, %s311
      %s315 = sphi 0, %s314
      %s331 = sphi 0, %s315
    $region4: #{tpu_custom_call.1} parent=1 // loop_header_branch
      %26 = sbr.rel (%p24) target = $region8
    $region5: #{tpu_custom_call.1} parent=1 // loop_body
      %s28 = ssub.s32 %s23, 1
      %s29 = ssub.s32 %s23, 2
      %s36 = sadd.s32 1, %s31
      %p37 = scmp.ge.s32.totalorder %s36, 1
      %s38 = scalar_select %p37, 0, %s36
      %s39 = sadd.s32 1, %s30
      %s40 = scalar_select %p37, %s39, %s30
      %p41 = scmp.ge.s32.totalorder %s40, 2
      %s42 = scalar_select %p41, 0, %s40
      %s43 = ssub.s32 %s30, %s42
      %s44 = ssub.s32 %s31, %s38
      %s45 = sor.u32 %s43, %s44
      %p46 = scmp.eq.s32.totalorder %s45, 0
      %s48 = sadd.s32 %s47, 1
      %s49 = scalar_select %p46, %s47, %s48
      %p52 = pneg %p46
      %p53 = scmp.eq.s32.totalorder %s23, 1
      %p54 = por %p52, %p53
      %p55 = scmp.ne.s32.totalorder %s47, %s50
      %p56 = scmp.eq.s32.totalorder %s23, 0
      %p57 = por %p55, %p56
      %p58 = scmp.ne.s32.totalorder %s47, %s50
      %p59 = scmp.eq.s32.totalorder %s28, 1
      %p60 = por %p58, %p59
      %p61 = scmp.ne.s32.totalorder %s50, %s51
      %p62 = scmp.eq.s32.totalorder %s28, 0
      %p63 = por %p61, %p62
      %p64 = scmp.ne.s32.totalorder %s50, %s51
      %p65 = scmp.eq.s32.totalorder %s29, 1
      %p66 = por %p64, %p65
      %p68 = scmp.ne.s32.totalorder %s51, %s67
      %p69 = scmp.eq.s32.totalorder %s29, 0
      %p70 = por %p68, %p69
      %s71 = ssub.s32 %s30, %s42
      %p72 = scmp.eq.s32.totalorder %s71, 0
      %s74 = sadd.s32 %s73, 1
      %s75 = scalar_select %p72, %s73, %s74
      %p78 = pneg %p72
      %p79 = scmp.eq.s32.totalorder %s23, 1
      %p80 = por %p78, %p79
      %p81 = scmp.ne.s32.totalorder %s73, %s76
      %p82 = scmp.eq.s32.totalorder %s23, 0
      %p83 = por %p81, %p82
      %p84 = scmp.ne.s32.totalorder %s73, %s76
      %p85 = scmp.eq.s32.totalorder %s28, 1
      %p86 = por %p84, %p85
      %p87 = scmp.ne.s32.totalorder %s76, %s77
      %p88 = scmp.eq.s32.totalorder %s28, 0
      %p89 = por %p87, %p88
      %p90 = scmp.ne.s32.totalorder %s76, %s77
      %p91 = scmp.eq.s32.totalorder %s29, 1
      %p92 = por %p90, %p91
      %p94 = scmp.ne.s32.totalorder %s77, %s93
      %p95 = scmp.eq.s32.totalorder %s29, 0
      %p96 = por %p94, %p95
      %s98 = sadd.s32 %s97, 1
      %p101 = scmp.eq.s32.totalorder %s23, 1
      %p102 = scmp.ne.s32.totalorder %s97, %s99
      %p103 = scmp.eq.s32.totalorder %s23, 0
      %p104 = por %p102, %p103
      %p105 = scmp.ne.s32.totalorder %s97, %s99
      %p106 = scmp.eq.s32.totalorder %s28, 1
      %p107 = por %p105, %p106
      %p108 = scmp.ne.s32.totalorder %s99, %s100
      %p109 = scmp.eq.s32.totalorder %s28, 0
      %p110 = por %p108, %p109
      %p111 = scmp.ne.s32.totalorder %s99, %s100
      %p112 = scmp.eq.s32.totalorder %s29, 1
      %p113 = por %p111, %p112
      %p115 = scmp.ne.s32.totalorder %s100, %s114
      %p116 = scmp.eq.s32.totalorder %s29, 0
      %p117 = por %p115, %p116
      %s119 = sadd.s32 %s118, 1
      %p122 = scmp.eq.s32.totalorder %s23, 1
      %p123 = scmp.ne.s32.totalorder %s118, %s120
      %p124 = scmp.eq.s32.totalorder %s23, 0
      %p125 = por %p123, %p124
      %p126 = scmp.ne.s32.totalorder %s118, %s120
      %p127 = scmp.eq.s32.totalorder %s28, 1
      %p128 = por %p126, %p127
      %p129 = scmp.ne.s32.totalorder %s120, %s121
      %p130 = scmp.eq.s32.totalorder %s28, 0
      %p131 = por %p129, %p130
      %p132 = scmp.ne.s32.totalorder %s120, %s121
      %p133 = scmp.eq.s32.totalorder %s29, 1
      %p134 = por %p132, %p133
      %p136 = scmp.ne.s32.totalorder %s121, %s135
      %p137 = scmp.eq.s32.totalorder %s29, 0
      %p138 = por %p136, %p137
      %s140 = sadd.s32 %s139, 1
      %p143 = scmp.eq.s32.totalorder %s23, 1
      %p144 = scmp.ne.s32.totalorder %s139, %s141
      %p145 = scmp.eq.s32.totalorder %s23, 0
      %p146 = por %p144, %p145
      %p147 = scmp.ne.s32.totalorder %s139, %s141
      %p148 = scmp.eq.s32.totalorder %s28, 1
      %p149 = por %p147, %p148
      %p150 = scmp.ne.s32.totalorder %s141, %s142
      %p151 = scmp.eq.s32.totalorder %s28, 0
      %p152 = por %p150, %p151
      %p153 = scmp.ne.s32.totalorder %s141, %s142
      %p154 = scmp.eq.s32.totalorder %s29, 1
      %p155 = por %p153, %p154
      %p157 = scmp.ne.s32.totalorder %s142, %s156
      %p158 = scmp.eq.s32.totalorder %s29, 0
      %p159 = por %p157, %p158
      %s161 = sadd.s32 %s160, 1
      %p164 = scmp.eq.s32.totalorder %s23, 1
      %p165 = scmp.ne.s32.totalorder %s160, %s162
      %p166 = scmp.eq.s32.totalorder %s23, 0
      %p167 = por %p165, %p166
      %p168 = scmp.ne.s32.totalorder %s160, %s162
      %p169 = scmp.eq.s32.totalorder %s28, 1
      %p170 = por %p168, %p169
      %p171 = scmp.ne.s32.totalorder %s162, %s163
      %p172 = scmp.eq.s32.totalorder %s28, 0
      %p173 = por %p171, %p172
      %p174 = scmp.ne.s32.totalorder %s162, %s163
      %p175 = scmp.eq.s32.totalorder %s29, 1
      %p176 = por %p174, %p175
      %p178 = scmp.ne.s32.totalorder %s163, %s177
      %p179 = scmp.eq.s32.totalorder %s29, 0
      %p180 = por %p178, %p179
      %s182 = sadd.s32 %s181, 1
      %p185 = scmp.eq.s32.totalorder %s23, 1
      %p186 = scmp.ne.s32.totalorder %s181, %s183
      %p187 = scmp.eq.s32.totalorder %s23, 0
      %p188 = por %p186, %p187
      %p189 = scmp.ne.s32.totalorder %s181, %s183
      %p190 = scmp.eq.s32.totalorder %s28, 1
      %p191 = por %p189, %p190
      %p192 = scmp.ne.s32.totalorder %s183, %s184
      %p193 = scmp.eq.s32.totalorder %s28, 0
      %p194 = por %p192, %p193
      %p195 = scmp.ne.s32.totalorder %s183, %s184
      %p196 = scmp.eq.s32.totalorder %s29, 1
      %p197 = por %p195, %p196
      %p199 = scmp.ne.s32.totalorder %s184, %s198
      %p200 = scmp.eq.s32.totalorder %s29, 0
      %p201 = por %p199, %p200
      %s203 = sadd.s32 %s202, 1
      %p206 = scmp.eq.s32.totalorder %s23, 1
      %p207 = scmp.ne.s32.totalorder %s202, %s204
      %p208 = scmp.eq.s32.totalorder %s23, 0
      %p209 = por %p207, %p208
      %p210 = scmp.ne.s32.totalorder %s202, %s204
      %p211 = scmp.eq.s32.totalorder %s28, 1
      %p212 = por %p210, %p211
      %p213 = scmp.ne.s32.totalorder %s204, %s205
      %p214 = scmp.eq.s32.totalorder %s28, 0
      %p215 = por %p213, %p214
      %p216 = scmp.ne.s32.totalorder %s204, %s205
      %p217 = scmp.eq.s32.totalorder %s29, 1
      %p218 = por %p216, %p217
      %p220 = scmp.ne.s32.totalorder %s205, %s219
      %p221 = scmp.eq.s32.totalorder %s29, 0
      %p222 = por %p220, %p221
      %s224 = sadd.s32 %s223, 1
      %p227 = scmp.eq.s32.totalorder %s23, 1
      %p228 = scmp.ne.s32.totalorder %s223, %s225
      %p229 = scmp.eq.s32.totalorder %s23, 0
      %p230 = por %p228, %p229
      %p231 = scmp.ne.s32.totalorder %s223, %s225
      %p232 = scmp.eq.s32.totalorder %s28, 1
      %p233 = por %p231, %p232
      %p234 = scmp.ne.s32.totalorder %s225, %s226
      %p235 = scmp.eq.s32.totalorder %s28, 0
      %p236 = por %p234, %p235
      %p237 = scmp.ne.s32.totalorder %s225, %s226
      %p238 = scmp.eq.s32.totalorder %s29, 1
      %p239 = por %p237, %p238
      %p241 = scmp.ne.s32.totalorder %s226, %s240
      %p242 = scmp.eq.s32.totalorder %s29, 0
      %p243 = por %p241, %p242
      %s245 = sadd.s32 %s244, 1
      %p248 = scmp.eq.s32.totalorder %s23, 1
      %p249 = scmp.ne.s32.totalorder %s244, %s246
      %p250 = scmp.eq.s32.totalorder %s23, 0
      %p251 = por %p249, %p250
      %p252 = scmp.ne.s32.totalorder %s244, %s246
      %p253 = scmp.eq.s32.totalorder %s28, 1
      %p254 = por %p252, %p253
      %p255 = scmp.ne.s32.totalorder %s246, %s247
      %p256 = scmp.eq.s32.totalorder %s28, 0
      %p257 = por %p255, %p256
      %p258 = scmp.ne.s32.totalorder %s246, %s247
      %p259 = scmp.eq.s32.totalorder %s29, 1
      %p260 = por %p258, %p259
      %p262 = scmp.ne.s32.totalorder %s247, %s261
      %p263 = scmp.eq.s32.totalorder %s29, 0
      %p264 = por %p262, %p263
      %s266 = sadd.s32 %s265, 1
      %p269 = scmp.eq.s32.totalorder %s23, 1
      %p270 = scmp.ne.s32.totalorder %s265, %s267
      %p271 = scmp.eq.s32.totalorder %s23, 0
      %p272 = por %p270, %p271
      %p273 = scmp.ne.s32.totalorder %s265, %s267
      %p274 = scmp.eq.s32.totalorder %s28, 1
      %p275 = por %p273, %p274
      %p276 = scmp.ne.s32.totalorder %s267, %s268
      %p277 = scmp.eq.s32.totalorder %s28, 0
      %p278 = por %p276, %p277
      %p279 = scmp.ne.s32.totalorder %s267, %s268
      %p280 = scmp.eq.s32.totalorder %s29, 1
      %p281 = por %p279, %p280
      %p283 = scmp.ne.s32.totalorder %s268, %s282
      %p284 = scmp.eq.s32.totalorder %s29, 0
      %p285 = por %p283, %p284
      %s287 = sadd.s32 %s286, 1
      %p290 = scmp.eq.s32.totalorder %s23, 1
      %p291 = scmp.ne.s32.totalorder %s286, %s288
      %p292 = scmp.eq.s32.totalorder %s23, 0
      %p293 = por %p291, %p292
      %p294 = scmp.ne.s32.totalorder %s286, %s288
      %p295 = scmp.eq.s32.totalorder %s28, 1
      %p296 = por %p294, %p295
      %p297 = scmp.ne.s32.totalorder %s288, %s289
      %p298 = scmp.eq.s32.totalorder %s28, 0
      %p299 = por %p297, %p298
      %p300 = scmp.ne.s32.totalorder %s288, %s289
      %p301 = scmp.eq.s32.totalorder %s29, 1
      %p302 = por %p300, %p301
      %p304 = scmp.ne.s32.totalorder %s289, %s303
      %p305 = scmp.eq.s32.totalorder %s29, 0
      %p306 = por %p304, %p305
      %s307 = ssub.s32 %s30, %s42
      %s308 = ssub.s32 %s31, %s38
      %s309 = sor.u32 %s307, %s308
      %p310 = scmp.eq.s32.totalorder %s309, 0
      %s312 = sadd.s32 %s311, 1
      %s313 = scalar_select %p310, %s311, %s312
      %p316 = pneg %p310
      %p317 = scmp.eq.s32.totalorder %s23, 1
      %p318 = por %p316, %p317
      %p319 = scmp.ne.s32.totalorder %s311, %s314
      %p320 = scmp.eq.s32.totalorder %s23, 0
      %p321 = por %p319, %p320
      %p322 = scmp.ne.s32.totalorder %s311, %s314
      %p323 = scmp.eq.s32.totalorder %s28, 1
      %p324 = por %p322, %p323
      %p325 = scmp.ne.s32.totalorder %s314, %s315
      %p326 = scmp.eq.s32.totalorder %s28, 0
      %p327 = por %p325, %p326
      %p328 = scmp.ne.s32.totalorder %s314, %s315
      %p329 = scmp.eq.s32.totalorder %s29, 1
      %p330 = por %p328, %p329
      %p332 = scmp.ne.s32.totalorder %s315, %s331
      %p333 = scmp.eq.s32.totalorder %s29, 0
      %p334 = por %p332, %p333
      %p335 = scmp.le.s32.totalorder 1, %s23
      %p336 = scmp.lt.s32.totalorder %s23, 3
      %p337 = pnand %p335, %p336
      %p338 = pneg %p337
      // Predicated region
      $region9: #{tpu_custom_call.1} parent=5 // pred_check
        _
      $region10: #{tpu_custom_call.1} parent=5 // pred_check_branch
        %340 = sbr.rel (%p337) target = $region12
      $region11: #{tpu_custom_call.1} parent=5 // pred_region
        %s341 = ssub.s32 %s23, 1
        // Predicated region
        $region13: #{tpu_custom_call.1} parent=11 // pred_check
          %p342 = pneg %p110
        $region14: #{tpu_custom_call.1} parent=11 // pred_check_branch
          %344 = sbr.rel (%p342) target = $region16
        $region15: #{tpu_custom_call.1} parent=11 // pred_region
          _
        $region16: #{tpu_custom_call.1} parent=11 // pred_fallthru
          _
        // Predicated region
        $region17: #{tpu_custom_call.1} parent=11 // pred_check
          %p345 = pneg %p131
        $region18: #{tpu_custom_call.1} parent=11 // pred_check_branch
          %347 = sbr.rel (%p345) target = $region20
        $region19: #{tpu_custom_call.1} parent=11 // pred_region
          _
        $region20: #{tpu_custom_call.1} parent=11 // pred_fallthru
          _
        // Predicated region
        $region21: #{tpu_custom_call.1} parent=11 // pred_check
          %p348 = pneg %p152
        $region22: #{tpu_custom_call.1} parent=11 // pred_check_branch
          %350 = sbr.rel (%p348) target = $region24
        $region23: #{tpu_custom_call.1} parent=11 // pred_region
          _
        $region24: #{tpu_custom_call.1} parent=11 // pred_fallthru
          _
        // Predicated region
        $region25: #{tpu_custom_call.1} parent=11 // pred_check
          %p351 = pneg %p173
        $region26: #{tpu_custom_call.1} parent=11 // pred_check_branch
          %353 = sbr.rel (%p351) target = $region28
        $region27: #{tpu_custom_call.1} parent=11 // pred_region
          _
        $region28: #{tpu_custom_call.1} parent=11 // pred_fallthru
          _
        // Predicated region
        $region29: #{tpu_custom_call.1} parent=11 // pred_check
          %p354 = pneg %p194
        $region30: #{tpu_custom_call.1} parent=11 // pred_check_branch
          %356 = sbr.rel (%p354) target = $region32
        $region31: #{tpu_custom_call.1} parent=11 // pred_region
          _
        $region32: #{tpu_custom_call.1} parent=11 // pred_fallthru
          _
        // Predicated region
        $region33: #{tpu_custom_call.1} parent=11 // pred_check
          %p357 = pneg %p215
        $region34: #{tpu_custom_call.1} parent=11 // pred_check_branch
          %359 = sbr.rel (%p357) target = $region36
        $region35: #{tpu_custom_call.1} parent=11 // pred_region
          _
        $region36: #{tpu_custom_call.1} parent=11 // pred_fallthru
          _
        // Predicated region
        $region37: #{tpu_custom_call.1} parent=11 // pred_check
          %p360 = pneg %p236
        $region38: #{tpu_custom_call.1} parent=11 // pred_check_branch
          %362 = sbr.rel (%p360) target = $region40
        $region39: #{tpu_custom_call.1} parent=11 // pred_region
          _
        $region40: #{tpu_custom_call.1} parent=11 // pred_fallthru
          _
        // Predicated region
        $region41: #{tpu_custom_call.1} parent=11 // pred_check
          %p363 = pneg %p257
        $region42: #{tpu_custom_call.1} parent=11 // pred_check_branch
          %365 = sbr.rel (%p363) target = $region44
        $region43: #{tpu_custom_call.1} parent=11 // pred_region
          _
        $region44: #{tpu_custom_call.1} parent=11 // pred_fallthru
          _
        // Predicated region
        $region45: #{tpu_custom_call.1} parent=11 // pred_check
          %p366 = pneg %p278
        $region46: #{tpu_custom_call.1} parent=11 // pred_check_branch
          %368 = sbr.rel (%p366) target = $region48
        $region47: #{tpu_custom_call.1} parent=11 // pred_region
          _
        $region48: #{tpu_custom_call.1} parent=11 // pred_fallthru
          _
        // Predicated region
        $region49: #{tpu_custom_call.1} parent=11 // pred_check
          %p369 = pneg %p299
        $region50: #{tpu_custom_call.1} parent=11 // pred_check_branch
          %371 = sbr.rel (%p369) target = $region52
        $region51: #{tpu_custom_call.1} parent=11 // pred_region
          _
        $region52: #{tpu_custom_call.1} parent=11 // pred_fallthru
          _
      $region12: #{tpu_custom_call.1} parent=5 // pred_fallthru
        _
      %p372 = scmp.lt.s32.totalorder %s23, 2
      // Predicated region
      $region53: #{tpu_custom_call.1} parent=5 // pred_check
        %p373 = pneg %p372
      $region54: #{tpu_custom_call.1} parent=5 // pred_check_branch
        %375 = sbr.rel (%p373) target = $region56
      $region55: #{tpu_custom_call.1} parent=5 // pred_region
        // Predicated region
        $region57: #{tpu_custom_call.1} parent=55 // pred_check
          %p376 = pneg %p57
        $region58: #{tpu_custom_call.1} parent=55 // pred_check_branch
          %378 = sbr.rel (%p376) target = $region60
        $region59: #{tpu_custom_call.1} parent=55 // pred_region
          %p379 = scmp.lt.s32.totalorder %s30, 1
          %s380 = scalar_select %p379, %s30, 1
          %p381 = scmp.lt.s32.totalorder %s31, 0
          %s382 = scalar_select %p381, %s31, 0
          %s383 = smul.addr %s382, 4
          %s384 = smul.addr %s380, 4
          %s385 = sadd.s32 %s383, %s384
          %s386 = smul.addr %s385, 8
          %s387 = scalar_lea.vmem %s0, %s386
        $region60: #{tpu_custom_call.1} parent=55 // pred_fallthru
          _
        // Predicated region
        $region61: #{tpu_custom_call.1} parent=55 // pred_check
          %p388 = pneg %p83
        $region62: #{tpu_custom_call.1} parent=55 // pred_check_branch
          %390 = sbr.rel (%p388) target = $region64
        $region63: #{tpu_custom_call.1} parent=55 // pred_region
          %p391 = scmp.lt.s32.totalorder %s30, 1
          %s392 = scalar_select %p391, %s30, 1
          %s393 = smul.addr %s392, 4
          %s394 = smul.addr %s393, 8
          %s395 = scalar_lea.vmem %s1, %s394
        $region64: #{tpu_custom_call.1} parent=55 // pred_fallthru
          _
      $region56: #{tpu_custom_call.1} parent=5 // pred_fallthru
        _
      %p396 = scmp.le.s32.totalorder 1, %s23
      %p397 = scmp.lt.s32.totalorder %s23, 3
      %p398 = pnand %p396, %p397
      %p399 = pneg %p398
      // Predicated region
      $region65: #{tpu_custom_call.1} parent=5 // pred_check
        _
      $region66: #{tpu_custom_call.1} parent=5 // pred_check_branch
        %401 = sbr.rel (%p398) target = $region68
      $region67: #{tpu_custom_call.1} parent=5 // pred_region
        %s402 = ssub.s32 %s23, 1
        %p403 = scmp.lt.s32.totalorder %s32, 1
        %s404 = scalar_select %p403, %s32, 1
        %p405 = scmp.lt.s32.totalorder %s33, 0
        %s406 = scalar_select %p405, %s33, 0
        %s407 = smul.addr %s406, 4
        %s408 = smul.addr %s404, 4
        %s409 = sadd.s32 %s407, %s408
        %s410 = smul.addr %s409, 8
        %s411 = scalar_lea.vmem %s0, %s410
        %p412 = pneg %p63
        %p413 = pneg %p60
        %p414 = scmp.lt.s32.totalorder %s32, 1
        %s415 = scalar_select %p414, %s32, 1
        %s416 = smul.addr %s415, 4
        %s417 = smul.addr %s416, 8
        %s418 = scalar_lea.vmem %s1, %s417
        %p419 = pneg %p89
        %p420 = pneg %p86
        %p421 = pneg %p110
        %p422 = pneg %p107
        %p423 = pneg %p131
        %p424 = pneg %p128
        %p425 = pneg %p152
        %p426 = pneg %p149
        %p427 = pneg %p173
        %p428 = pneg %p170
        %p429 = pneg %p194
        %p430 = pneg %p191
        %p431 = pneg %p215
        %p432 = pneg %p212
        %p433 = pneg %p236
        %p434 = pneg %p233
        %p435 = pneg %p257
        %p436 = pneg %p254
        %p437 = pneg %p278
        %p438 = pneg %p275
        %p439 = pneg %p299
        %p440 = pneg %p296
        %p441 = pneg %p327
        %p442 = pneg %p324
        %s443 = sand.u32 %s314, 1
        %s444 = scalar_lea.sflag [#allocation5], %s443
        %s445 = sand.u32 %s314, 1
        %s446 = smul.addr %s445, 2
        %s447 = scalar_lea.vmem [#allocation4], %s446
        %p448 = scmp.lt.s32.totalorder %s32, 1
        %s449 = scalar_select %p448, %s32, 1
        %p450 = scmp.lt.s32.totalorder %s33, 0
        %s451 = scalar_select %p450, %s33, 0
        %s452 = smul.addr %s451, 4
        %s453 = smul.addr %s449, 4
        %s454 = sadd.s32 %s452, %s453
        %s455 = smul.addr %s454, 8
        %s456 = scalar_lea.vmem %s0, %s455
        %p457 = scmp.lt.s32.totalorder %s32, 1
        %s458 = scalar_select %p457, %s32, 1
        %s459 = smul.addr %s458, 4
        %s460 = smul.addr %s459, 8
        %s461 = scalar_lea.vmem %s1, %s460
        %s462 = smul.u32 2, %s33
        %v464 = vld [vmem:[%s461] sm:$0xff]
        %v465 = vld [vmem:[%s461 + $0x8] sm:$0xff]
        %v466 = vld [vmem:[%s461 + $0x10] sm:$0xff]
        %v467 = vld [vmem:[%s461 + $0x18] sm:$0xff]
        %472 = vrot.lane.b32.xlu0 %v464, 16
        %v473 = vpop.permute.xlu0 %472
        %474 = vrot.lane.b32.xlu0 %v465, 16
        %v475 = vpop.permute.xlu0 %474
        %476 = vrot.lane.b32.xlu0 %v466, 16
        %v477 = vpop.permute.xlu0 %476
        %478 = vrot.lane.b32.xlu0 %v467, 16
        %v479 = vpop.permute.xlu0 %478
        %484 = vrot.lane.b32.xlu0 %v464, 32
        %v485 = vpop.permute.xlu0 %484
        %486 = vrot.lane.b32.xlu0 %v465, 32
        %v487 = vpop.permute.xlu0 %486
        %488 = vrot.lane.b32.xlu0 %v466, 32
        %v489 = vpop.permute.xlu0 %488
        %490 = vrot.lane.b32.xlu0 %v467, 32
        %v491 = vpop.permute.xlu0 %490
        %496 = vrot.lane.b32.xlu0 %v464, 48
        %v497 = vpop.permute.xlu0 %496
        %498 = vrot.lane.b32.xlu0 %v465, 48
        %v499 = vpop.permute.xlu0 %498
        %500 = vrot.lane.b32.xlu0 %v466, 48
        %v501 = vpop.permute.xlu0 %500
        %502 = vrot.lane.b32.xlu0 %v467, 48
        %v503 = vpop.permute.xlu0 %502
        %508 = vrot.lane.b32.xlu0 %v464, 64
        %v509 = vpop.permute.xlu0 %508
        %510 = vrot.lane.b32.xlu0 %v465, 64
        %v511 = vpop.permute.xlu0 %510
        %512 = vrot.lane.b32.xlu0 %v466, 64
        %v513 = vpop.permute.xlu0 %512
        %514 = vrot.lane.b32.xlu0 %v467, 64
        %v515 = vpop.permute.xlu0 %514
        %520 = vrot.lane.b32.xlu0 %v464, 80
        %v521 = vpop.permute.xlu0 %520
        %522 = vrot.lane.b32.xlu0 %v465, 80
        %v523 = vpop.permute.xlu0 %522
        %524 = vrot.lane.b32.xlu0 %v466, 80
        %v525 = vpop.permute.xlu0 %524
        %526 = vrot.lane.b32.xlu0 %v467, 80
        %v527 = vpop.permute.xlu0 %526
        %532 = vrot.lane.b32.xlu0 %v464, 96
        %v533 = vpop.permute.xlu0 %532
        %534 = vrot.lane.b32.xlu0 %v465, 96
        %v535 = vpop.permute.xlu0 %534
        %536 = vrot.lane.b32.xlu0 %v466, 96
        %v537 = vpop.permute.xlu0 %536
        %538 = vrot.lane.b32.xlu0 %v467, 96
        %v539 = vpop.permute.xlu0 %538
        %544 = vrot.lane.b32.xlu0 %v464, 112
        %v545 = vpop.permute.xlu0 %544
        %546 = vrot.lane.b32.xlu0 %v465, 112
        %v547 = vpop.permute.xlu0 %546
        %548 = vrot.lane.b32.xlu0 %v466, 112
        %v549 = vpop.permute.xlu0 %548
        %550 = vrot.lane.b32.xlu0 %v467, 112
        %v551 = vpop.permute.xlu0 %550
        %vm556 = vcmask 130048
        %v557 = vsel %vm556, %v464, %v473
        %v558 = vsel %vm556, %v465, %v475
        %v559 = vsel %vm556, %v466, %v477
        %v560 = vsel %vm556, %v467, %v479
        %vm561 = vcmask 261120
        %v562 = vsel %vm561, %v557, %v485
        %v563 = vsel %vm561, %v558, %v487
        %v564 = vsel %vm561, %v559, %v489
        %v565 = vsel %vm561, %v560, %v491
        %vm566 = vcmask 392192
        %v567 = vsel %vm566, %v562, %v497
        %v568 = vsel %vm566, %v563, %v499
        %v569 = vsel %vm566, %v564, %v501
        %v570 = vsel %vm566, %v565, %v503
        %vm571 = vcmask 523264
        %v572 = vsel %vm571, %v567, %v509
        %v573 = vsel %vm571, %v568, %v511
        %v574 = vsel %vm571, %v569, %v513
        %v575 = vsel %vm571, %v570, %v515
        %vm576 = vcmask 654336
        %v577 = vsel %vm576, %v572, %v521
        %v578 = vsel %vm576, %v573, %v523
        %v579 = vsel %vm576, %v574, %v525
        %v580 = vsel %vm576, %v575, %v527
        %vm581 = vcmask 785408
        %v582 = vsel %vm581, %v577, %v533
        %v583 = vsel %vm581, %v578, %v535
        %v584 = vsel %vm581, %v579, %v537
        %v585 = vsel %vm581, %v580, %v539
        %vm586 = vcmask 916480
        %v587 = vsel %vm586, %v582, %v545
        %v588 = vsel %vm586, %v583, %v547
        %v589 = vsel %vm586, %v584, %v549
        %v590 = vsel %vm586, %v585, %v551
        %v591 = vld [vmem:[%s456] sm:$0xff]
        %v592 = vld [vmem:[%s456 + $0x8] sm:$0xff]
        %v593 = vld [vmem:[%s456 + $0x10] sm:$0xff]
        %v594 = vld [vmem:[%s456 + $0x18] sm:$0xff]
        %596 = vset.pattern.permute.xlu0 0
        %597 = vperm.xlu0 %596, %v591
        %v598 = vpop.permute.xlu0 %597
        %601 = vset.pattern.permute.xlu0 0
        %602 = vperm.xlu0 %601, %v592
        %v603 = vpop.permute.xlu0 %602
        %606 = vset.pattern.permute.xlu0 0
        %607 = vperm.xlu0 %606, %v593
        %v608 = vpop.permute.xlu0 %607
        %611 = vset.pattern.permute.xlu0 0
        %612 = vperm.xlu0 %611, %v594
        %v613 = vpop.permute.xlu0 %612
        %615 = vset.pattern.permute.xlu0 1
        %616 = vperm.xlu0 %615, %v591
        %v617 = vpop.permute.xlu0 %616
        %619 = vset.pattern.permute.xlu0 1
        %620 = vperm.xlu0 %619, %v592
        %v621 = vpop.permute.xlu0 %620
        %623 = vset.pattern.permute.xlu0 1
        %624 = vperm.xlu0 %623, %v593
        %v625 = vpop.permute.xlu0 %624
        %627 = vset.pattern.permute.xlu0 1
        %628 = vperm.xlu0 %627, %v594
        %v629 = vpop.permute.xlu0 %628
        %631 = vset.pattern.permute.xlu0 2
        %632 = vperm.xlu0 %631, %v591
        %v633 = vpop.permute.xlu0 %632
        %635 = vset.pattern.permute.xlu0 2
        %636 = vperm.xlu0 %635, %v592
        %v637 = vpop.permute.xlu0 %636
        %639 = vset.pattern.permute.xlu0 2
        %640 = vperm.xlu0 %639, %v593
        %v641 = vpop.permute.xlu0 %640
        %643 = vset.pattern.permute.xlu0 2
        %644 = vperm.xlu0 %643, %v594
        %v645 = vpop.permute.xlu0 %644
        %647 = vset.pattern.permute.xlu0 3
        %648 = vperm.xlu0 %647, %v591
        %v649 = vpop.permute.xlu0 %648
        %651 = vset.pattern.permute.xlu0 3
        %652 = vperm.xlu0 %651, %v592
        %v653 = vpop.permute.xlu0 %652
        %655 = vset.pattern.permute.xlu0 3
        %656 = vperm.xlu0 %655, %v593
        %v657 = vpop.permute.xlu0 %656
        %659 = vset.pattern.permute.xlu0 3
        %660 = vperm.xlu0 %659, %v594
        %v661 = vpop.permute.xlu0 %660
        %663 = vset.pattern.permute.xlu0 4
        %664 = vperm.xlu0 %663, %v591
        %v665 = vpop.permute.xlu0 %664
        %667 = vset.pattern.permute.xlu0 4
        %668 = vperm.xlu0 %667, %v592
        %v669 = vpop.permute.xlu0 %668
        %671 = vset.pattern.permute.xlu0 4
        %672 = vperm.xlu0 %671, %v593
        %v673 = vpop.permute.xlu0 %672
        %675 = vset.pattern.permute.xlu0 4
        %676 = vperm.xlu0 %675, %v594
        %v677 = vpop.permute.xlu0 %676
        %679 = vset.pattern.permute.xlu0 5
        %680 = vperm.xlu0 %679, %v591
        %v681 = vpop.permute.xlu0 %680
        %683 = vset.pattern.permute.xlu0 5
        %684 = vperm.xlu0 %683, %v592
        %v685 = vpop.permute.xlu0 %684
        %687 = vset.pattern.permute.xlu0 5
        %688 = vperm.xlu0 %687, %v593
        %v689 = vpop.permute.xlu0 %688
        %691 = vset.pattern.permute.xlu0 5
        %692 = vperm.xlu0 %691, %v594
        %v693 = vpop.permute.xlu0 %692
        %695 = vset.pattern.permute.xlu0 6
        %696 = vperm.xlu0 %695, %v591
        %v697 = vpop.permute.xlu0 %696
        %699 = vset.pattern.permute.xlu0 6
        %700 = vperm.xlu0 %699, %v592
        %v701 = vpop.permute.xlu0 %700
        %703 = vset.pattern.permute.xlu0 6
        %704 = vperm.xlu0 %703, %v593
        %v705 = vpop.permute.xlu0 %704
        %707 = vset.pattern.permute.xlu0 6
        %708 = vperm.xlu0 %707, %v594
        %v709 = vpop.permute.xlu0 %708
        %711 = vset.pattern.permute.xlu0 7
        %712 = vperm.xlu0 %711, %v591
        %v713 = vpop.permute.xlu0 %712
        %715 = vset.pattern.permute.xlu0 7
        %716 = vperm.xlu0 %715, %v592
        %v717 = vpop.permute.xlu0 %716
        %719 = vset.pattern.permute.xlu0 7
        %720 = vperm.xlu0 %719, %v593
        %v721 = vpop.permute.xlu0 %720
        %723 = vset.pattern.permute.xlu0 7
        %724 = vperm.xlu0 %723, %v594
        %v725 = vpop.permute.xlu0 %724
        %v727 = vsel %vm556, %v598, %v617
        %v728 = vsel %vm556, %v603, %v621
        %v729 = vsel %vm556, %v608, %v625
        %v730 = vsel %vm556, %v613, %v629
        %v731 = vsel %vm561, %v727, %v633
        %v732 = vsel %vm561, %v728, %v637
        %v733 = vsel %vm561, %v729, %v641
        %v734 = vsel %vm561, %v730, %v645
        %v735 = vsel %vm566, %v731, %v649
        %v736 = vsel %vm566, %v732, %v653
        %v737 = vsel %vm566, %v733, %v657
        %v738 = vsel %vm566, %v734, %v661
        %v739 = vsel %vm571, %v735, %v665
        %v740 = vsel %vm571, %v736, %v669
        %v741 = vsel %vm571, %v737, %v673
        %v742 = vsel %vm571, %v738, %v677
        %v743 = vsel %vm576, %v739, %v681
        %v744 = vsel %vm576, %v740, %v685
        %v745 = vsel %vm576, %v741, %v689
        %v746 = vsel %vm576, %v742, %v693
        %v747 = vsel %vm581, %v743, %v697
        %v748 = vsel %vm581, %v744, %v701
        %v749 = vsel %vm581, %v745, %v705
        %v750 = vsel %vm581, %v746, %v709
        %v751 = vsel %vm586, %v747, %v713
        %v752 = vsel %vm586, %v748, %v717
        %v753 = vsel %vm586, %v749, %v721
        %v754 = vsel %vm586, %v750, %v725
        %v755 = vsub.f32 %v751, %v587
        %v756 = vsub.f32 %v752, %v588
        %v757 = vsub.f32 %v753, %v589
        %v758 = vsub.f32 %v754, %v590
        %v759 = vand.u32 2147483647, %v755
        %v760 = vand.u32 2147483647, %v756
        %v761 = vand.u32 2147483647, %v757
        %v762 = vand.u32 2147483647, %v758
        %v763 = vpack.c.bf16 %v760, %v759
        %v764 = vpack.c.bf16 %v762, %v761
        %765 = vst [vmem:[#allocation2] sm:$0xff] %v763
        %766 = vst [vmem:[#allocation2 + $0x10] sm:$0xff] %v764
        %767 = vset.pattern.permute.xlu0 8
        %768 = vperm.xlu0 %767, %v591
        %v769 = vpop.permute.xlu0 %768
        %771 = vset.pattern.permute.xlu0 8
        %772 = vperm.xlu0 %771, %v592
        %v773 = vpop.permute.xlu0 %772
        %775 = vset.pattern.permute.xlu0 8
        %776 = vperm.xlu0 %775, %v593
        %v777 = vpop.permute.xlu0 %776
        %779 = vset.pattern.permute.xlu0 8
        %780 = vperm.xlu0 %779, %v594
        %v781 = vpop.permute.xlu0 %780
        %783 = vset.pattern.permute.xlu0 9
        %784 = vperm.xlu0 %783, %v591
        %v785 = vpop.permute.xlu0 %784
        %787 = vset.pattern.permute.xlu0 9
        %788 = vperm.xlu0 %787, %v592
        %v789 = vpop.permute.xlu0 %788
        %791 = vset.pattern.permute.xlu0 9
        %792 = vperm.xlu0 %791, %v593
        %v793 = vpop.permute.xlu0 %792
        %795 = vset.pattern.permute.xlu0 9
        %796 = vperm.xlu0 %795, %v594
        %v797 = vpop.permute.xlu0 %796
        %799 = vset.pattern.permute.xlu0 10
        %800 = vperm.xlu0 %799, %v591
        %v801 = vpop.permute.xlu0 %800
        %803 = vset.pattern.permute.xlu0 10
        %804 = vperm.xlu0 %803, %v592
        %v805 = vpop.permute.xlu0 %804
        %807 = vset.pattern.permute.xlu0 10
        %808 = vperm.xlu0 %807, %v593
        %v809 = vpop.permute.xlu0 %808
        %811 = vset.pattern.permute.xlu0 10
        %812 = vperm.xlu0 %811, %v594
        %v813 = vpop.permute.xlu0 %812
        %815 = vset.pattern.permute.xlu0 11
        %816 = vperm.xlu0 %815, %v591
        %v817 = vpop.permute.xlu0 %816
        %819 = vset.pattern.permute.xlu0 11
        %820 = vperm.xlu0 %819, %v592
        %v821 = vpop.permute.xlu0 %820
        %823 = vset.pattern.permute.xlu0 11
        %824 = vperm.xlu0 %823, %v593
        %v825 = vpop.permute.xlu0 %824
        %827 = vset.pattern.permute.xlu0 11
        %828 = vperm.xlu0 %827, %v594
        %v829 = vpop.permute.xlu0 %828
        %831 = vset.pattern.permute.xlu0 12
        %832 = vperm.xlu0 %831, %v591
        %v833 = vpop.permute.xlu0 %832
        %835 = vset.pattern.permute.xlu0 12
        %836 = vperm.xlu0 %835, %v592
        %v837 = vpop.permute.xlu0 %836
        %839 = vset.pattern.permute.xlu0 12
        %840 = vperm.xlu0 %839, %v593
        %v841 = vpop.permute.xlu0 %840
        %843 = vset.pattern.permute.xlu0 12
        %844 = vperm.xlu0 %843, %v594
        %v845 = vpop.permute.xlu0 %844
        %847 = vset.pattern.permute.xlu0 13
        %848 = vperm.xlu0 %847, %v591
        %v849 = vpop.permute.xlu0 %848
        %851 = vset.pattern.permute.xlu0 13
        %852 = vperm.xlu0 %851, %v592
        %v853 = vpop.permute.xlu0 %852
        %855 = vset.pattern.permute.xlu0 13
        %856 = vperm.xlu0 %855, %v593
        %v857 = vpop.permute.xlu0 %856
        %859 = vset.pattern.permute.xlu0 13
        %860 = vperm.xlu0 %859, %v594
        %v861 = vpop.permute.xlu0 %860
        %863 = vset.pattern.permute.xlu0 14
        %864 = vperm.xlu0 %863, %v591
        %v865 = vpop.permute.xlu0 %864
        %867 = vset.pattern.permute.xlu0 14
        %868 = vperm.xlu0 %867, %v592
        %v869 = vpop.permute.xlu0 %868
        %871 = vset.pattern.permute.xlu0 14
        %872 = vperm.xlu0 %871, %v593
        %v873 = vpop.permute.xlu0 %872
        %875 = vset.pattern.permute.xlu0 14
        %876 = vperm.xlu0 %875, %v594
        %v877 = vpop.permute.xlu0 %876
        %879 = vset.pattern.permute.xlu0 15
        %880 = vperm.xlu0 %879, %v591
        %v881 = vpop.permute.xlu0 %880
        %883 = vset.pattern.permute.xlu0 15
        %884 = vperm.xlu0 %883, %v592
        %v885 = vpop.permute.xlu0 %884
        %887 = vset.pattern.permute.xlu0 15
        %888 = vperm.xlu0 %887, %v593
        %v889 = vpop.permute.xlu0 %888
        %891 = vset.pattern.permute.xlu0 15
        %892 = vperm.xlu0 %891, %v594
        %v893 = vpop.permute.xlu0 %892
        %v895 = vsel %vm556, %v769, %v785
        %v896 = vsel %vm556, %v773, %v789
        %v897 = vsel %vm556, %v777, %v793
        %v898 = vsel %vm556, %v781, %v797
        %v899 = vsel %vm561, %v895, %v801
        %v900 = vsel %vm561, %v896, %v805
        %v901 = vsel %vm561, %v897, %v809
        %v902 = vsel %vm561, %v898, %v813
        %v903 = vsel %vm566, %v899, %v817
        %v904 = vsel %vm566, %v900, %v821
        %v905 = vsel %vm566, %v901, %v825
        %v906 = vsel %vm566, %v902, %v829
        %v907 = vsel %vm571, %v903, %v833
        %v908 = vsel %vm571, %v904, %v837
        %v909 = vsel %vm571, %v905, %v841
        %v910 = vsel %vm571, %v906, %v845
        %v911 = vsel %vm576, %v907, %v849
        %v912 = vsel %vm576, %v908, %v853
        %v913 = vsel %vm576, %v909, %v857
        %v914 = vsel %vm576, %v910, %v861
        %v915 = vsel %vm581, %v911, %v865
        %v916 = vsel %vm581, %v912, %v869
        %v917 = vsel %vm581, %v913, %v873
        %v918 = vsel %vm581, %v914, %v877
        %v919 = vsel %vm586, %v915, %v881
        %v920 = vsel %vm586, %v916, %v885
        %v921 = vsel %vm586, %v917, %v889
        %v922 = vsel %vm586, %v918, %v893
        %v923 = vsub.f32 %v919, %v587
        %v924 = vsub.f32 %v920, %v588
        %v925 = vsub.f32 %v921, %v589
        %v926 = vsub.f32 %v922, %v590
        %v927 = vand.u32 2147483647, %v923
        %v928 = vand.u32 2147483647, %v924
        %v929 = vand.u32 2147483647, %v925
        %v930 = vand.u32 2147483647, %v926
        %v931 = vpack.c.bf16 %v928, %v927
        %v932 = vpack.c.bf16 %v930, %v929
        %933 = vst [vmem:[#allocation2 + $0x8] sm:$0xff] %v931
        %934 = vst [vmem:[#allocation2 + $0x18] sm:$0xff] %v932
        %v935 = vld [vmem:[#allocation2] sm:$0xff]
        %v936 = vld [vmem:[#allocation2 + $0x8] sm:$0xff]
        %v937 = vld [vmem:[#allocation2 + $0x10] sm:$0xff]
        %v938 = vld [vmem:[#allocation2 + $0x18] sm:$0xff]
        %v939 = vld [vmem:[%s2] sm:$0xf]
        %v940 = vld [vmem:[%s2 + $0x4] sm:$0xf]
        %v941 = vld [vmem:[%s3] sm:$0xff]
        %v942 = vld [vmem:[%s3 + $0x8] sm:$0xff]
        %944 = vset.pattern.permute.xlu0 0
        %945 = vperm.xlu0 %944, %v941
        %v946 = vpop.permute.xlu0 %945
        %949 = vset.pattern.permute.xlu0 0
        %950 = vperm.xlu0 %949, %v942
        %v951 = vpop.permute.xlu0 %950
        %v955 = vunpack.c.l.b16 %v939
        %v956 = vunpack.c.l.b16 %v940
        %v957 = vpack.c.b16 %v956, %v955
        %v959 = vsel %vm561, %v957, 0
        %961 = vmatprep.subr.bf16.mxu0 %v936
        %962 = vmatpush1.bf16.msra.mxu0 %v935
        %963 = vmatprep.subr.bf16.mxu0 %v938
        %964 = vmatpush1.bf16.msra.mxu0 %v937
        %965 = vmatprep.subr.bf16.mxu0 0
        %966 = vmatpush1.bf16.msra.mxu0 0
        %967 = vmatprep.subr.bf16.mxu0 0
        %968 = vmatpush1.bf16.msra.mxu0 0
        %969 = vmatprep.subr.bf16.mxu0 0
        %970 = vmatpush1.bf16.msra.mxu0 0
        %971 = vmatprep.subr.bf16.mxu0 0
        %972 = vmatpush1.bf16.msra.mxu0 0
        %973 = vmatprep.subr.bf16.mxu0 0
        %974 = vmatpush1.bf16.msra.mxu0 0
        %975 = vmatprep.subr.bf16.mxu0 0
        %976 = vmatpush1.bf16.msra.mxu0 0
        %977 = vmatprep.subr.bf16.mxu0 0
        %978 = vmatpush1.bf16.msra.mxu0 0
        %979 = vmatprep.subr.bf16.mxu0 0
        %980 = vmatpush1.bf16.msra.mxu0 0
        %981 = vmatprep.subr.bf16.mxu0 0
        %982 = vmatpush1.bf16.msra.mxu0 0
        %983 = vmatprep.subr.bf16.mxu0 0
        %984 = vmatpush1.bf16.msra.mxu0 0
        %985 = vmatprep.subr.bf16.mxu0 0
        %986 = vmatpush1.bf16.msra.mxu0 0
        %987 = vmatprep.subr.bf16.mxu0 0
        %988 = vmatpush1.bf16.msra.mxu0 0
        %989 = vmatprep.subr.bf16.mxu0 0
        %990 = vmatpush1.bf16.msra.mxu0 0
        %991 = vmatprep.subr.bf16.mxu0 0
        %992 = vmatpush1.bf16.msra.mxu0 0
        %993 = vmatprep.mubr.bf16.mxu0 0
        %994 = vmatmul.mubr.bf16.gmra.mrb[0].mxu0 %v959
        %v995 = vpop.f32.mrb[0].mxu0
        %v996 = vadd.f32 %v946, %v995
        %v997 = vpop.f32.mrb[0].mxu0
        %v998 = vadd.f32 %v946, %v997
        %v999 = vpop.f32.mrb[0].mxu0
        %v1000 = vadd.f32 %v951, %v999
        %v1001 = vpop.f32.mrb[0].mxu0
        %v1002 = vadd.f32 %v951, %v1001
        %1003 = vdwg.mxu0
        %v1004 = vmul.f32 %v996, 0.01
        %v1005 = vmul.f32 %v998, 0.01
        %v1006 = vmul.f32 %v1000, 0.01
        %v1007 = vmul.f32 %v1002, 0.01
        %v1008 = vmax.f32 %v996, %v1004
        %v1009 = vmax.f32 %v998, %v1005
        %v1010 = vmax.f32 %v1000, %v1006
        %v1011 = vmax.f32 %v1002, %v1007
        %v1012 = vld [vmem:[%s4] sm:$0xf]
        %v1013 = vld [vmem:[%s4 + $0x4] sm:$0xf]
        %v1014 = vld [vmem:[%s5] sm:$0xff]
        %v1015 = vld [vmem:[%s5 + $0x8] sm:$0xff]
        %v1016 = vpack.c.bf16 %v1010, %v1008
        %v1017 = vpack.c.bf16 %v1011, %v1009
        %1019 = vset.pattern.permute.xlu0 0
        %1020 = vperm.xlu0 %1019, %v1014
        %v1021 = vpop.permute.xlu0 %1020
        %1024 = vset.pattern.permute.xlu0 0
        %1025 = vperm.xlu0 %1024, %v1015
        %v1026 = vpop.permute.xlu0 %1025
        %v1030 = vunpack.c.l.b16 %v1012
        %v1031 = vunpack.c.l.b16 %v1013
        %v1032 = vpack.c.b16 %v1031, %v1030
        %v1034 = vsel %vm556, %v1032, 0
        %1036 = vmatprep.subr.bf16.mxu0 %v1017
        %1037 = vmatpush1.bf16.msra.mxu0 %v1016
        %1038 = vmatprep.subr.bf16.mxu0 0
        %1039 = vmatpush1.bf16.msra.mxu0 0
        %1040 = vmatprep.subr.bf16.mxu0 0
        %1041 = vmatpush1.bf16.msra.mxu0 0
        %1042 = vmatprep.subr.bf16.mxu0 0
        %1043 = vmatpush1.bf16.msra.mxu0 0
        %1044 = vmatprep.subr.bf16.mxu0 0
        %1045 = vmatpush1.bf16.msra.mxu0 0
        %1046 = vmatprep.subr.bf16.mxu0 0
        %1047 = vmatpush1.bf16.msra.mxu0 0
        %1048 = vmatprep.subr.bf16.mxu0 0
        %1049 = vmatpush1.bf16.msra.mxu0 0
        %1050 = vmatprep.subr.bf16.mxu0 0
        %1051 = vmatpush1.bf16.msra.mxu0 0
        %1052 = vmatprep.subr.bf16.mxu0 0
        %1053 = vmatpush1.bf16.msra.mxu0 0
        %1054 = vmatprep.subr.bf16.mxu0 0
        %1055 = vmatpush1.bf16.msra.mxu0 0
        %1056 = vmatprep.subr.bf16.mxu0 0
        %1057 = vmatpush1.bf16.msra.mxu0 0
        %1058 = vmatprep.subr.bf16.mxu0 0
        %1059 = vmatpush1.bf16.msra.mxu0 0
        %1060 = vmatprep.subr.bf16.mxu0 0
        %1061 = vmatpush1.bf16.msra.mxu0 0
        %1062 = vmatprep.subr.bf16.mxu0 0
        %1063 = vmatpush1.bf16.msra.mxu0 0
        %1064 = vmatprep.subr.bf16.mxu0 0
        %1065 = vmatpush1.bf16.msra.mxu0 0
        %1066 = vmatprep.subr.bf16.mxu0 0
        %1067 = vmatpush1.bf16.msra.mxu0 0
        %1068 = vmatprep.mubr.bf16.mxu0 0
        %1069 = vmatmul.mubr.bf16.gmra.mrb[0].mxu0 %v1034
        %v1070 = vpop.f32.mrb[0].mxu0
        %v1071 = vadd.f32 %v1021, %v1070
        %v1072 = vpop.f32.mrb[0].mxu0
        %v1073 = vadd.f32 %v1021, %v1072
        %v1074 = vpop.f32.mrb[0].mxu0
        %v1075 = vadd.f32 %v1026, %v1074
        %v1076 = vpop.f32.mrb[0].mxu0
        %v1077 = vadd.f32 %v1026, %v1076
        %1078 = vdwg.mxu0
        %v1079 = vmul.f32 %v1071, 0.01
        %v1080 = vmul.f32 %v1073, 0.01
        %v1081 = vmul.f32 %v1075, 0.01
        %v1082 = vmul.f32 %v1077, 0.01
        %v1083 = vmax.f32 %v1071, %v1079
        %v1084 = vmax.f32 %v1073, %v1080
        %v1085 = vmax.f32 %v1075, %v1081
        %v1086 = vmax.f32 %v1077, %v1082
        %v1087 = vld [vmem:[%s6] sm:$0xf]
        %v1088 = vld [vmem:[%s7] sm:$0xff]
        %v1089 = vpack.c.bf16 %v1085, %v1083
        %v1090 = vpack.c.bf16 %v1086, %v1084
        %1092 = vset.pattern.permute.xlu0 0
        %1093 = vperm.xlu0 %1092, %v1088
        %v1094 = vpop.permute.xlu0 %1093
        %v1097 = vsel %vm556, %v1087, 0
        %1099 = vmatprep.subr.bf16.mxu0 %v1090
        %1100 = vmatpush1.bf16.msra.mxu0 %v1089
        %1101 = vmatprep.subr.bf16.mxu0 0
        %1102 = vmatpush1.bf16.msra.mxu0 0
        %1103 = vmatprep.subr.bf16.mxu0 0
        %1104 = vmatpush1.bf16.msra.mxu0 0
        %1105 = vmatprep.subr.bf16.mxu0 0
        %1106 = vmatpush1.bf16.msra.mxu0 0
        %1107 = vmatprep.subr.bf16.mxu0 0
        %1108 = vmatpush1.bf16.msra.mxu0 0
        %1109 = vmatprep.subr.bf16.mxu0 0
        %1110 = vmatpush1.bf16.msra.mxu0 0
        %1111 = vmatprep.subr.bf16.mxu0 0
        %1112 = vmatpush1.bf16.msra.mxu0 0
        %1113 = vmatprep.subr.bf16.mxu0 0
        %1114 = vmatpush1.bf16.msra.mxu0 0
        %1115 = vmatprep.subr.bf16.mxu0 0
        %1116 = vmatpush1.bf16.msra.mxu0 0
        %1117 = vmatprep.subr.bf16.mxu0 0
        %1118 = vmatpush1.bf16.msra.mxu0 0
        %1119 = vmatprep.subr.bf16.mxu0 0
        %1120 = vmatpush1.bf16.msra.mxu0 0
        %1121 = vmatprep.subr.bf16.mxu0 0
        %1122 = vmatpush1.bf16.msra.mxu0 0
        %1123 = vmatprep.subr.bf16.mxu0 0
        %1124 = vmatpush1.bf16.msra.mxu0 0
        %1125 = vmatprep.subr.bf16.mxu0 0
        %1126 = vmatpush1.bf16.msra.mxu0 0
        %1127 = vmatprep.subr.bf16.mxu0 0
        %1128 = vmatpush1.bf16.msra.mxu0 0
        %1129 = vmatprep.subr.bf16.mxu0 0
        %1130 = vmatpush1.bf16.msra.mxu0 0
        %1131 = vmatprep.mubr.bf16.mxu0 0
        %1132 = vmatmul.mubr.bf16.gmra.mrb[0].mxu0 %v1097
        %v1133 = vpop.f32.mrb[0].mxu0
        %v1134 = vadd.f32 %v1094, %v1133
        %v1135 = vpop.f32.mrb[0].mxu0
        %v1136 = vadd.f32 %v1094, %v1135
        %v1137 = vpop.f32.mrb[0].mxu0
        %v1138 = vpop.f32.mrb[0].mxu0
        %1139 = vdwg.mxu0
        %v1140 = vmul.f32 %v1134, 0.01
        %v1141 = vmul.f32 %v1136, 0.01
        %v1142 = vmax.f32 %v1134, %v1140
        %v1143 = vmax.f32 %v1136, %v1141
        %v1144 = vld [vmem:[%s8] sm:$0xf]
        %v1145 = vld [vmem:[%s9] sm:$0xff]
        %v1146 = vpack.c.bf16 %v1142, %v1142
        %v1147 = vpack.c.bf16 %v1143, %v1143
        %1149 = vset.pattern.permute.xlu0 0
        %1150 = vperm.xlu0 %1149, %v1145
        %v1151 = vpop.permute.xlu0 %1150
        %vm1153 = vcmask 64512
        %v1155 = vsel %vm1153, %v1144, 0
        %vm1157 = vcmask 1043456
        %v1159 = vsel %vm1157, %v1146, 0
        %v1162 = vsel %vm1157, %v1147, 0
        %1164 = vmatprep.subr.bf16.mxu0 %v1162
        %1165 = vmatpush1.bf16.msra.mxu0 %v1159
        %1166 = vmatprep.subr.bf16.mxu0 0
        %1167 = vmatpush1.bf16.msra.mxu0 0
        %1168 = vmatprep.subr.bf16.mxu0 0
        %1169 = vmatpush1.bf16.msra.mxu0 0
        %1170 = vmatprep.subr.bf16.mxu0 0
        %1171 = vmatpush1.bf16.msra.mxu0 0
        %1172 = vmatprep.subr.bf16.mxu0 0
        %1173 = vmatpush1.bf16.msra.mxu0 0
        %1174 = vmatprep.subr.bf16.mxu0 0
        %1175 = vmatpush1.bf16.msra.mxu0 0
        %1176 = vmatprep.subr.bf16.mxu0 0
        %1177 = vmatpush1.bf16.msra.mxu0 0
        %1178 = vmatprep.subr.bf16.mxu0 0
        %1179 = vmatpush1.bf16.msra.mxu0 0
        %1180 = vmatprep.subr.bf16.mxu0 0
        %1181 = vmatpush1.bf16.msra.mxu0 0
        %1182 = vmatprep.subr.bf16.mxu0 0
        %1183 = vmatpush1.bf16.msra.mxu0 0
        %1184 = vmatprep.subr.bf16.mxu0 0
        %1185 = vmatpush1.bf16.msra.mxu0 0
        %1186 = vmatprep.subr.bf16.mxu0 0
        %1187 = vmatpush1.bf16.msra.mxu0 0
        %1188 = vmatprep.subr.bf16.mxu0 0
        %1189 = vmatpush1.bf16.msra.mxu0 0
        %1190 = vmatprep.subr.bf16.mxu0 0
        %1191 = vmatpush1.bf16.msra.mxu0 0
        %1192 = vmatprep.subr.bf16.mxu0 0
        %1193 = vmatpush1.bf16.msra.mxu0 0
        %1194 = vmatprep.subr.bf16.mxu0 0
        %1195 = vmatpush1.bf16.msra.mxu0 0
        %1196 = vmatprep.mubr.bf16.mxu0 0
        %1197 = vmatmul.mubr.bf16.gmra.mrb[0].mxu0 %v1155
        %v1198 = vpop.f32.mrb[0].mxu0
        %v1199 = vadd.f32 %v1151, %v1198
        %v1200 = vpop.f32.mrb[0].mxu0
        %v1201 = vadd.f32 %v1151, %v1200
        %v1202 = vpop.f32.mrb[0].mxu0
        %v1203 = vpop.f32.mrb[0].mxu0
        %1204 = vdwg.mxu0
        %v1205 = vmul.f32 %v1199, 0.01
        %v1206 = vmul.f32 %v1201, 0.01
        %v1207 = vmax.f32 %v1199, %v1205
        %v1208 = vmax.f32 %v1201, %v1206
        %v1209 = vld [vmem:[%s10] sm:$0xff]
        %v1210 = vld [vmem:[#allocation3] sm:$0x1]
        %1212 = vset.pattern.permute.xlu0 0
        %1213 = vperm.xlu0 %1212, %v1209
        %v1214 = vpop.permute.xlu0 %1213
        %v1216 = vmul.f32 %v1207, %v1214
        %v1217 = vmul.f32 %v1208, %v1214
        %v1218 = vrot.slane %v1216, 4
        %v1219 = vadd.f32 %v1216, %v1218
        %v1220 = vrot.slane %v1219, 2
        %v1221 = vadd.f32 %v1219, %v1220
        %v1222 = vrot.slane %v1221, 1
        %v1223 = vadd.f32 %v1221, %v1222
        %v1224 = vrot.slane %v1217, 4
        %v1225 = vadd.f32 %v1217, %v1224
        %v1226 = vrot.slane %v1225, 2
        %v1227 = vadd.f32 %v1225, %v1226
        %v1228 = vrot.slane %v1227, 1
        %v1229 = vadd.f32 %v1227, %v1228
        %1231 = vset.pattern.permute.xlu0 0
        %1232 = vperm.xlu0 %1231, %v1210
        %v1233 = vpop.permute.xlu0 %1232
        %v1235 = vlaneseq
        %v1236 = vshrl.u32 %v1235, 7
        %v1237 = vsub.s32 0, %v1236
        %v1238 = vrot.slane %v1233, %v1237
        %v1239 = vadd.f32 %v1223, %v1238
        %v1240 = vadd.f32 %v1229, %v1238
        %v1243 = vcombine.low %v1239, %v1240
        %v1245 = vunpack.c.l.s4 1966171168
        %v1246 = vunpack.c.0.s8 %v1245
        %v1247 = vlaneseq
        %v1248 = vshrl.u32 %v1247, 7
        %v1249 = vsub.s32 %v1246, %v1248
        %v1250 = vrot.slane %v1243, %v1249
        %v1252 = vunpack.c.l.s4 1966171168
        %v1253 = vunpack.c.0.s8 %v1252
        %v1254 = vlaneseq
        %v1255 = vshrl.u32 %v1254, 7
        %v1256 = vsub.s32 %v1253, %v1255
        %v1257 = vrot.slane %v1250, %v1256
        %v1259 = vlaneseq
        %vm1260 = vcmp.ge.s32.totalorder %v1259, 0
        %vm1261 = vcmp.lt.s32.totalorder %v1259, 256
        %vm1262 = vmand %vm1260, %vm1261
        %1263 = vst.msk [vmem:[%s447] sm:$0x3] %vm1262, %v1257
        %s1264 = sand.u32 %s314, 1
        %s1265 = scalar_lea.sflag [#allocation5], %s1264
        %s1266 = sand.u32 %s314, 1
        %s1267 = smul.addr %s1266, 2
        %s1268 = scalar_lea.vmem [#allocation4], %s1267
        // Predicated region
        $region69: #{tpu_custom_call.1} parent=67 // pred_check
          %p1269 = pneg %p324
        $region70: #{tpu_custom_call.1} parent=67 // pred_check_branch
          %1271 = sbr.rel (%p1269) target = $region72
        $region71: #{tpu_custom_call.1} parent=67 // pred_region
          %s1272 = smul.u32 2, %s33
          %s1274 = ssub.s32 32, 32
          %1275 = vsyncadd %s1265, %s1274
          %s1276 = smul.addr %s32, 2
          %s1277 = sadd.s32 %s1272, %s1276
          %s1278 = smul.addr %s1277, 16
          %s1279 = scalar_lea.hbm %s12, %s1278
          %s1281 = sshll.u32 %s1268, 4
          %s1282 = int_to_ptr.vmem [resolvable:$true] %s1281
          %1284 = dma.vmem_to_hbm [thread:$0]  %s1282, 32, %s1279, %s1265
        $region72: #{tpu_custom_call.1} parent=67 // pred_fallthru
          _
      $region68: #{tpu_custom_call.1} parent=5 // pred_fallthru
        _
      %p1285 = scmp.le.s32.totalorder 2, %s23
      // Predicated region
      $region73: #{tpu_custom_call.1} parent=5 // pred_check
        %p1286 = pneg %p1285
      $region74: #{tpu_custom_call.1} parent=5 // pred_check_branch
        %1288 = sbr.rel (%p1286) target = $region76
      $region75: #{tpu_custom_call.1} parent=5 // pred_region
        %s1289 = ssub.s32 %s23, 2
        // Predicated region
        $region77: #{tpu_custom_call.1} parent=75 // pred_check
          %p1290 = pneg %p330
        $region78: #{tpu_custom_call.1} parent=75 // pred_check_branch
          %1292 = sbr.rel (%p1290) target = $region80
        $region79: #{tpu_custom_call.1} parent=75 // pred_region
          %s1293 = sand.u32 %s315, 1
          %s1294 = scalar_lea.sflag [#allocation5], %s1293
          %s1295 = sand.u32 %s315, 1
          %s1296 = smul.addr %s1295, 2
          %s1297 = scalar_lea.vmem [#allocation4], %s1296
          %1298 = dma.done %s1294, 32
        $region80: #{tpu_custom_call.1} parent=75 // pred_fallthru
          _
      $region76: #{tpu_custom_call.1} parent=5 // pred_fallthru
        _
    $region6: #{tpu_custom_call.1} parent=1 // loop_footer
      %s27 = sadd.s32 1, %s23
    $region7: #{tpu_custom_call.1} parent=1 // loop_footer_branch
      %22 = sbr.rel target = $region3
    $region8: #{tpu_custom_call.1} parent=1 // loop_exit
      _
    %1299 = vsyncpa [#allocation5], 1
    %s1300 = scalar_lea.sflag [#allocation5], 1
    %1301 = vsyncpa %s1300, 1

</llo_original>
